<compile_context>
chip_gen: v7x
topology: tpu7x:2x2x1
jax: 0.10.0
libtpu: 0.0.40
codegen_flags: <defaults>
</compile_context>

<pallas_src>
import functools
import math

import jax
import jax.numpy as jnp
import numpy as np
from jax.experimental import pallas as pl
from jax.experimental.pallas import tpu as pltpu


def pam_kernel(xq_ref, kv_ref, wq_ref, bq_ref, gamma_ref, out_ref,
               q_scr, m_scr, l_scr, acc_scr, *,
               compute_dtype, n_valid, mask_kv):
    """One (batch, q_tile, kv_tile) grid step of position attention.

    xq_ref : (1, tq, C)        input tile (orig dtype) - residual + Q proj
    kv_ref : (1, tkv, Crp+C)   precomputed fused K|V tile (compute_dtype)
    wq_ref : (C, Crp)          Wq^T, zero-padded, compute_dtype
    bq_ref : (1, Crp)          bq, zero-padded, f32
    gamma_ref : (1,)           residual scale (SMEM scalar)
    """
    ki = pl.program_id(2)
    n_kv = pl.num_programs(2)

    # --- per-(b, q_tile) init: project Q once & cache, reset softmax state ---
    @pl.when(ki == 0)
    def _():
        xq = xq_ref[0].astype(compute_dtype)                      # (tq, C) bf16
        q = jnp.dot(xq, wq_ref[...],
                    preferred_element_type=jnp.float32) + bq_ref[...]
        q_scr[...] = q.astype(q_scr.dtype)                        # (tq, Crp)
        m_scr[...] = jnp.full(m_scr.shape, -jnp.inf, jnp.float32)
        l_scr[...] = jnp.zeros(l_scr.shape, jnp.float32)
        acc_scr[...] = jnp.zeros(acc_scr.shape, jnp.float32)

    crp = q_scr.shape[-1]
    kv = kv_ref[0]                                                # (tkv, Crp+C)
    k = kv[:, :crp]                                               # lane-aligned split
    v = kv[:, crp:]

    # energy[i, j] = <q_i, k_j>: contract last axes directly (bf16 MXU, f32 acc)
    s = jax.lax.dot_general(q_scr[...], k, (((1,), (1,)), ((), ())),
                            preferred_element_type=jnp.float32)   # (tq, tkv) f32

    if mask_kv:
        # N was padded up to a tile multiple; mask padded kv columns.
        tkv = s.shape[-1]
        col = ki * tkv + jax.lax.broadcasted_iota(jnp.int32, s.shape, 1)
        s = jnp.where(col < n_valid, s, -1e30)

    # --- online softmax update (VPU/EUP math in f32; MXU operands bf16) ---
    m_prev = m_scr[...]
    m_new = jnp.maximum(m_prev, jnp.max(s, axis=-1, keepdims=True))
    alpha = jnp.exp(m_prev - m_new)
    p = jnp.exp(s - m_new)
    l_scr[...] = alpha * l_scr[...] + jnp.sum(p, axis=-1, keepdims=True)
    acc_scr[...] = alpha * acc_scr[...] + jnp.dot(
        p.astype(v.dtype), v, preferred_element_type=jnp.float32)
    m_scr[...] = m_new

    # --- finalize: normalize with approx (EUP) reciprocal, gamma*out + x ---
    @pl.when(ki == n_kv - 1)
    def _():
        inv_l = pl.reciprocal(l_scr[...], approx=True)   # ~1e-3 rel; approx=False if needed
        out = acc_scr[...] * inv_l                       # (tq, C) f32
        res = gamma_ref[0] * out + xq_ref[0].astype(jnp.float32)
        out_ref[0] = res.astype(out_ref.dtype)


def _round_up(n, m):
    return ((n + m - 1) // m) * m


def _default_tile(n, max_tile=512):
    # Lane/sublane friendly tile; padding + in-kernel masking handle the rest.
    return min(max_tile, _round_up(n, 128))


def _vmem_limit_bytes(tq, tkv, C, Crp, x_bytes, kv_bytes, out_bytes):
    need = 2 * tq * C * x_bytes                        # x query tiles (2-deep)
    need += 2 * tkv * (Crp + C) * kv_bytes             # fused K|V tiles (2-deep)
    need += 2 * tq * C * out_bytes                     # output tiles (2-deep)
    need += 2 * (C * Crp * kv_bytes + Crp * 4)         # weights + bias
    need += tq * Crp * kv_bytes + 2 * tq * 4 + tq * C * 4   # scratch (q, m, l, acc)
    need = int(need * 1.5) + (8 << 20)                 # headroom + compiler scratch
    # Cap at 48 MiB so the same config stays safe on v7x (64 MiB VMEM / TC);
    # shrink tiles rather than raising this cap.
    return max(32 << 20, min(need, 48 << 20))


def pam_forward(x_nchw, wq, bq, wk, bk, wv, bv, gamma, *,
                tq=None, tkv=None, compute_dtype=jnp.bfloat16):
    """x_nchw: (B, C, H, W); 1x1-conv weights wq/wk: (Cr, C), wv: (C, C)."""
    B, C, H, W = x_nchw.shape
    Cr = wq.shape[0]
    N = H * W

    tq = _default_tile(N) if tq is None else tq
    tkv = _default_tile(N) if tkv is None else tkv
    assert tq % 8 == 0 and tkv % 8 == 0, "tile sizes must be multiples of 8"

    # Pad the reduced channel dim to a lane-dense multiple of 128: the K|V
    # split lands on a vreg lane boundary and the QK contraction fills the MXU.
    # Padded Wq/Wk rows & biases are zero, so energies are unchanged.
    Crp = max(128, _round_up(Cr, 128))

    # Pad N so both tile sizes divide it; padded kv columns masked in-kernel,
    # padded q rows are sliced off afterwards.
    t_align = (tq * tkv) // math.gcd(tq, tkv)
    N_pad = _round_up(N, t_align)

    # NCHW -> (B, N, C), flattening h*W + w exactly as PyTorch's .view does.
    # TODO(synk): if adjacent layers can produce/consume NHWC, these two
    # transposes (entry + exit) can be dropped entirely.
    x_bnc = jnp.transpose(x_nchw, (0, 2, 3, 1)).reshape(B, N, C)
    if N_pad != N:
        x_bnc = jnp.pad(x_bnc, ((0, 0), (0, N_pad - N), (0, 0)))

    cd = compute_dtype
    # Zero-padded, transposed 1x1-conv weights (bf16 MXU operands).
    wq_t = jnp.zeros((C, Crp), cd).at[:, :Cr].set(wq.T.astype(cd))
    bq_p = jnp.zeros((1, Crp), jnp.float32).at[:, :Cr].set(bq.astype(jnp.float32))
    wkv_t = (jnp.zeros((C, Crp + C), cd)
             .at[:, :Cr].set(wk.T.astype(cd))
             .at[:, Crp:].set(wv.T.astype(cd)))
    bkv = (jnp.zeros((Crp + C,), jnp.float32)
           .at[:Cr].set(bk.astype(jnp.float32))
           .at[Crp:].set(bv.astype(jnp.float32)))

    # Hoisted fused K|V projection: ONE bf16 matmul per batch (f32 accumulate),
    # stored bf16 and streamed into the kernel — no per-grid-step reprojection.
    kv_bnc = (jnp.einsum('bnc,cd->bnd', x_bnc.astype(cd), wkv_t,
                         preferred_element_type=jnp.float32) + bkv).astype(cd)

    gamma1 = jnp.asarray(gamma, jnp.float32).reshape(1,)      # scalar -> SMEM

    grid = (B, N_pad // tq, N_pad // tkv)
    vmem_limit = _vmem_limit_bytes(tq, tkv, C, Crp,
                                   x_bnc.dtype.itemsize,
                                   jnp.dtype(cd).itemsize,
                                   x_bnc.dtype.itemsize)

    kernel = functools.partial(pam_kernel, compute_dtype=cd, n_valid=N,
                               mask_kv=(N_pad != N))

    out_bnc = pl.pallas_call(
        kernel,
        out_shape=jax.ShapeDtypeStruct((B, N_pad, C), x_bnc.dtype),
        grid_spec=pltpu.PrefetchScalarGridSpec(
            num_scalar_prefetch=0,
            grid=grid,
            in_specs=[
                pl.BlockSpec((1, tq, C), lambda b, qi, ki: (b, qi, 0)),         # x (query tile)
                pl.BlockSpec((1, tkv, Crp + C), lambda b, qi, ki: (b, ki, 0)),  # fused K|V tile
                pl.BlockSpec((C, Crp), lambda b, qi, ki: (0, 0)),               # Wq^T (padded)
                pl.BlockSpec((1, Crp), lambda b, qi, ki: (0, 0)),               # bq (padded)
                pl.BlockSpec(memory_space=pltpu.MemorySpace.SMEM),              # gamma scalar
            ],
            out_specs=pl.BlockSpec((1, tq, C), lambda b, qi, ki: (b, qi, 0)),
            scratch_shapes=[
                pltpu.VMEM((tq, Crp), cd),            # cached Q projection (bf16)
                pltpu.VMEM((tq, 1), jnp.float32),     # running max m
                pltpu.VMEM((tq, 1), jnp.float32),     # running denom l
                pltpu.VMEM((tq, C), jnp.float32),     # unnormalized output acc
            ],
        ),
        compiler_params=pltpu.CompilerParams(
            # batch & query tiles are independent (megacore / v7x 2-TC split;
            # keep B * q_tiles >= 2 and ideally even for balanced cores);
            # kv is the online-softmax reduction axis.
            dimension_semantics=("parallel", "parallel", "arbitrary"),
            vmem_limit_bytes=vmem_limit),
    )(x_bnc, kv_bnc, wq_t, bq_p, gamma1)

    out_bnc = out_bnc[:, :N, :]
    return jnp.transpose(out_bnc.reshape(B, H, W, C), (0, 3, 1, 2))


def pam_reference(x_nchw, wq, bq, wk, bk, wv, bv, gamma):
    """Pure-JAX reference mirroring the PyTorch forward."""
    B, C, H, W = x_nchw.shape
    N = H * W
    x_flat = x_nchw.reshape(B, C, N)                               # (B, C, N)
    q = jnp.einsum('oc,bcn->bon', wq, x_flat) + bq[None, :, None]  # (B, Cr, N)
    k = jnp.einsum('oc,bcn->bon', wk, x_flat) + bk[None, :, None]
    v = jnp.einsum('oc,bcn->bon', wv, x_flat) + bv[None, :, None]  # (B, C, N)
    energy = jnp.einsum('bci,bcj->bij', q, k)                      # (B, N, N)
    attn = jax.nn.softmax(energy, axis=-1)
    out = jnp.einsum('bcj,bij->bci', v, attn)                      # (B, C, N)
    out = out.reshape(B, C, H, W)
    return gamma * out + x_nchw


if __name__ == "__main__":
    key = jax.random.PRNGKey(0)

    def make_params(key, C, reduction):
        Cr = max(1, C // reduction)
        ks = jax.random.split(key, 6)
        wq = jax.random.normal(ks[0], (Cr, C), jnp.float32) * 0.1
        bq = jax.random.normal(ks[1], (Cr,), jnp.float32) * 0.1
        wk = jax.random.normal(ks[2], (Cr, C), jnp.float32) * 0.1
        bk = jax.random.normal(ks[3], (Cr,), jnp.float32) * 0.1
        wv = jax.random.normal(ks[4], (C, C), jnp.float32) * 0.1
        bv = jax.random.normal(ks[5], (C,), jnp.float32) * 0.1
        return wq, bq, wk, bk, wv, bv

    pam = jax.jit(pam_forward, static_argnames=("tq", "tkv", "compute_dtype"))

    # PyTorch inits gamma=0 (output would trivially equal x); use a nonzero
    # value so the attention path is actually exercised.
    gamma = jnp.float32(0.3)

    # --- Test 1: N divisible by the tiles; multi-kv-step flash path ---------
    B, C, H, W = 2, 16, 16, 16
    k0, k1 = jax.random.split(key)
    x = jax.random.normal(k0, (B, C, H, W), jnp.float32)
    params = make_params(k1, C, reduction=8)
    out = jax.block_until_ready(pam(x, *params, gamma, tq=128, tkv=128))
    ref = pam_reference(x, *params, gamma)
    # bf16 MXU operands + approx reciprocal + flash accumulation order.
    np.testing.assert_allclose(np.asarray(out), np.asarray(ref),
                               rtol=1e-2, atol=1e-2)

    # --- Test 2: awkward spatial size -> N padded to a tile, kv masked ------
    B2, C2, H2, W2 = 1, 16, 10, 10
    k2, k3 = jax.random.split(k1)
    x2 = jax.random.normal(k2, (B2, C2, H2, W2), jnp.float32)
    params2 = make_params(k3, C2, reduction=8)
    out2 = jax.block_until_ready(pam(x2, *params2, gamma))
    ref2 = pam_reference(x2, *params2, gamma)
    np.testing.assert_allclose(np.asarray(out2), np.asarray(ref2),
                               rtol=1e-2, atol=1e-2)

    print("KERNEL_OK")
</pallas_src>

<mosaic_0001>
module attributes {stable_mosaic.version = 11 : i64} {
  func.func @pam_kernel(%arg0: i32, %arg1: i32, %arg2: i32, %arg3: memref<1x128x16xf32, #tpu.memory_space<vmem>>, %arg4: memref<1x128x144xbf16, #tpu.memory_space<vmem>>, %arg5: memref<16x128xbf16, #tpu.memory_space<vmem>>, %arg6: memref<1x128xf32, #tpu.memory_space<vmem>>, %arg7: memref<1xf32, #tpu.memory_space<smem>>, %arg8: memref<1x128x16xf32, #tpu.memory_space<vmem>>, %arg9: memref<128x128xbf16, #tpu.memory_space<vmem>>, %arg10: memref<128x1xf32, #tpu.memory_space<vmem>>, %arg11: memref<128x1xf32, #tpu.memory_space<vmem>>, %arg12: memref<128x16xf32, #tpu.memory_space<vmem>>) attributes {dimension_semantics = [#tpu.dimension_semantics<parallel>, #tpu.dimension_semantics<parallel>, #tpu.dimension_semantics<arbitrary>], iteration_bounds = array<i64: 2, 2, 2>, scalar_prefetch = 0 : i64, scratch_operands = 4 : i64, tpu.core_type = #tpu.core_type<tc>, window_params = [{transform_indices = @transform_0, window_bounds = array<i64: 1, 128, 16>}, {transform_indices = @transform_1, window_bounds = array<i64: 1, 128, 144>}, {pipeline_mode = #tpu.pipeline_mode<synchronous>, transform_indices = @transform_2, window_bounds = array<i64: 16, 128>}, {pipeline_mode = #tpu.pipeline_mode<synchronous>, transform_indices = @transform_3, window_bounds = array<i64: 1, 128>}, {transform_indices = @transform_4, window_bounds = array<i64: 1>}, {transform_indices = @transform_5, window_bounds = array<i64: 1, 128, 16>}]} {
    %c0_i32 = arith.constant 0 : i32
    %0 = arith.cmpi eq, %arg2, %c0_i32 : i32
    %1 = arith.extui %0 : i1 to i32
    %c0_i32_0 = arith.constant 0 : i32
    %2 = arith.cmpi ne, %1, %c0_i32_0 : i32
    scf.if %2 {
      %c0_21 = arith.constant 0 : index
      %c0_22 = arith.constant 0 : index
      %c0_23 = arith.constant 0 : index
      %35 = vector.load %arg3[%c0_21, %c0_22, %c0_23] : memref<1x128x16xf32, #tpu.memory_space<vmem>>, vector<1x128x16xf32>
      %36 = vector.shape_cast %35 : vector<1x128x16xf32> to vector<128x16xf32>
      %37 = arith.truncf %36 : vector<128x16xf32> to vector<128x16xbf16>
      %c0_24 = arith.constant 0 : index
      %c0_25 = arith.constant 0 : index
      %38 = vector.load %arg5[%c0_24, %c0_25] : memref<16x128xbf16, #tpu.memory_space<vmem>>, vector<16x128xbf16>
      %cst_26 = arith.constant dense<0.000000e+00> : vector<128x128xf32>
      %39 = tpu.matmul %37, %38, %cst_26 {dimension_numbers = #tpu.dot_dimension_numbers<[1], [0], [0], [1], [0, 0, 1, 1], [], []>} : vector<128x16xbf16>, vector<16x128xbf16>, vector<128x128xf32> -> vector<128x128xf32>
      %c0_27 = arith.constant 0 : index
      %c0_28 = arith.constant 0 : index
      %40 = vector.load %arg6[%c0_27, %c0_28] : memref<1x128xf32, #tpu.memory_space<vmem>>, vector<1x128xf32>
      %41 = vector.broadcast %40 : vector<1x128xf32> to vector<128x128xf32>
      %42 = arith.addf %39, %41 : vector<128x128xf32>
      %43 = arith.truncf %42 : vector<128x128xf32> to vector<128x128xbf16>
      %c0_29 = arith.constant 0 : index
      %c0_30 = arith.constant 0 : index
      %44 = vector.load %arg9[%c0_29, %c0_30] : memref<128x128xbf16, #tpu.memory_space<vmem>>, vector<128x128xbf16>
      tpu.vector_store %arg9[%c0_29, %c0_30], %43 {strides = array<i32>} : memref<128x128xbf16, #tpu.memory_space<vmem>>, vector<128x128xbf16>,
      %cst_31 = arith.constant 0xFF800000 : f32
      %45 = vector.broadcast %cst_31 : f32 to vector<128x1xf32>
      %c0_32 = arith.constant 0 : index
      %c0_33 = arith.constant 0 : index
      %46 = vector.load %arg10[%c0_32, %c0_33] : memref<128x1xf32, #tpu.memory_space<vmem>>, vector<128x1xf32>
      tpu.vector_store %arg10[%c0_32, %c0_33], %45 {strides = array<i32>} : memref<128x1xf32, #tpu.memory_space<vmem>>, vector<128x1xf32>,
      %cst_34 = arith.constant 0.000000e+00 : f32
      %47 = vector.broadcast %cst_34 : f32 to vector<128x1xf32>
      %c0_35 = arith.constant 0 : index
      %c0_36 = arith.constant 0 : index
      %48 = vector.load %arg11[%c0_35, %c0_36] : memref<128x1xf32, #tpu.memory_space<vmem>>, vector<128x1xf32>
      tpu.vector_store %arg11[%c0_35, %c0_36], %47 {strides = array<i32>} : memref<128x1xf32, #tpu.memory_space<vmem>>, vector<128x1xf32>,
      %cst_37 = arith.constant 0.000000e+00 : f32
      %49 = vector.broadcast %cst_37 : f32 to vector<128x16xf32>
      %c0_38 = arith.constant 0 : index
      %c0_39 = arith.constant 0 : index
      %50 = vector.load %arg12[%c0_38, %c0_39] : memref<128x16xf32, #tpu.memory_space<vmem>>, vector<128x16xf32>
      tpu.vector_store %arg12[%c0_38, %c0_39], %49 {strides = array<i32>} : memref<128x16xf32, #tpu.memory_space<vmem>>, vector<128x16xf32>,
    } else {
    }
    %c0 = arith.constant 0 : index
    %c0_1 = arith.constant 0 : index
    %c0_2 = arith.constant 0 : index
    %3 = vector.load %arg4[%c0, %c0_1, %c0_2] : memref<1x128x144xbf16, #tpu.memory_space<vmem>>, vector<1x128x144xbf16>
    %4 = vector.shape_cast %3 : vector<1x128x144xbf16> to vector<128x144xbf16>
    %5 = vector.extract_strided_slice %4 {offsets = [0, 0], sizes = [128, 128], strides = [1, 1]} : vector<128x144xbf16> to vector<128x128xbf16>
    %6 = vector.extract_strided_slice %4 {offsets = [0, 128], sizes = [128, 16], strides = [1, 1]} : vector<128x144xbf16> to vector<128x16xbf16>
    %c0_3 = arith.constant 0 : index
    %c0_4 = arith.constant 0 : index
    %7 = vector.load %arg9[%c0_3, %c0_4] : memref<128x128xbf16, #tpu.memory_space<vmem>>, vector<128x128xbf16>
    %cst = arith.constant dense<0.000000e+00> : vector<128x128xf32>
    %8 = tpu.matmul %7, %5, %cst {dimension_numbers = #tpu.dot_dimension_numbers<[1], [1], [0], [0], [0, 0, 1, 0], [], []>} : vector<128x128xbf16>, vector<128x128xbf16>, vector<128x128xf32> -> vector<128x128xf32>
    %c0_5 = arith.constant 0 : index
    %c0_6 = arith.constant 0 : index
    %9 = vector.load %arg10[%c0_5, %c0_6] : memref<128x1xf32, #tpu.memory_space<vmem>>, vector<128x1xf32>
    %cst_7 = arith.constant dense<0xFF800000> : vector<128xf32>
    %10 = vector.multi_reduction <maximumf>, %8, %cst_7 [1] : vector<128x128xf32> to vector<128xf32>
    %11 = vector.shape_cast %10 : vector<128xf32> to vector<128x1xf32>
    %12 = arith.maximumf %9, %11 : vector<128x1xf32>
    %13 = arith.subf %9, %12 : vector<128x1xf32>
    %14 = math.exp %13 : vector<128x1xf32>
    %15 = vector.broadcast %12 : vector<128x1xf32> to vector<128x128xf32>
    %16 = arith.subf %8, %15 : vector<128x128xf32>
    %17 = math.exp %16 : vector<128x128xf32>
    %c0_8 = arith.constant 0 : index
    %c0_9 = arith.constant 0 : index
    %18 = vector.load %arg11[%c0_8, %c0_9] : memref<128x1xf32, #tpu.memory_space<vmem>>, vector<128x1xf32>
    %19 = arith.mulf %14, %18 : vector<128x1xf32>
    %cst_10 = arith.constant dense<0.000000e+00> : vector<128xf32>
    %20 = vector.multi_reduction <add>, %17, %cst_10 [1] : vector<128x128xf32> to vector<128xf32>
    %21 = vector.shape_cast %20 : vector<128xf32> to vector<128x1xf32>
    %22 = arith.addf %19, %21 : vector<128x1xf32>
    %c0_11 = arith.constant 0 : index
    %c0_12 = arith.constant 0 : index
    %23 = vector.load %arg11[%c0_11, %c0_12] : memref<128x1xf32, #tpu.memory_space<vmem>>, vector<128x1xf32>
    tpu.vector_store %arg11[%c0_11, %c0_12], %22 {strides = array<i32>} : memref<128x1xf32, #tpu.memory_space<vmem>>, vector<128x1xf32>,
    %c0_13 = arith.constant 0 : index
    %c0_14 = arith.constant 0 : index
    %24 = vector.load %arg12[%c0_13, %c0_14] : memref<128x16xf32, #tpu.memory_space<vmem>>, vector<128x16xf32>
    %25 = vector.broadcast %14 : vector<128x1xf32> to vector<128x16xf32>
    %26 = arith.mulf %25, %24 : vector<128x16xf32>
    %27 = arith.truncf %17 : vector<128x128xf32> to vector<128x128xbf16>
    %cst_15 = arith.constant dense<0.000000e+00> : vector<128x16xf32>
    %28 = tpu.matmul %27, %6, %cst_15 {dimension_numbers = #tpu.dot_dimension_numbers<[1], [0], [0], [1], [0, 0, 1, 1], [], []>} : vector<128x128xbf16>, vector<128x16xbf16>, vector<128x16xf32> -> vector<128x16xf32>
    %29 = arith.addf %26, %28 : vector<128x16xf32>
    %c0_16 = arith.constant 0 : index
    %c0_17 = arith.constant 0 : index
    %30 = vector.load %arg12[%c0_16, %c0_17] : memref<128x16xf32, #tpu.memory_space<vmem>>, vector<128x16xf32>
    tpu.vector_store %arg12[%c0_16, %c0_17], %29 {strides = array<i32>} : memref<128x16xf32, #tpu.memory_space<vmem>>, vector<128x16xf32>,
    %c0_18 = arith.constant 0 : index
    %c0_19 = arith.constant 0 : index
    %31 = vector.load %arg10[%c0_18, %c0_19] : memref<128x1xf32, #tpu.memory_space<vmem>>, vector<128x1xf32>
    tpu.vector_store %arg10[%c0_18, %c0_19], %12 {strides = array<i32>} : memref<128x1xf32, #tpu.memory_space<vmem>>, vector<128x1xf32>,
    %c1_i32 = arith.constant 1 : i32
    %32 = arith.cmpi eq, %arg2, %c1_i32 : i32
    %33 = arith.extui %32 : i1 to i32
    %c0_i32_20 = arith.constant 0 : i32
    %34 = arith.cmpi ne, %33, %c0_i32_20 : i32
    scf.if %34 {
      %c0_21 = arith.constant 0 : index
      %c0_22 = arith.constant 0 : index
      %35 = vector.load %arg11[%c0_21, %c0_22] : memref<128x1xf32, #tpu.memory_space<vmem>>, vector<128x1xf32>
      %36 = tpu.reciprocal %35 {approx = true} : vector<128x1xf32> -> vector<128x1xf32>
      %c0_23 = arith.constant 0 : index
      %c0_24 = arith.constant 0 : index
      %37 = vector.load %arg12[%c0_23, %c0_24] : memref<128x16xf32, #tpu.memory_space<vmem>>, vector<128x16xf32>
      %38 = vector.broadcast %36 : vector<128x1xf32> to vector<128x16xf32>
      %39 = arith.mulf %37, %38 : vector<128x16xf32>
      %c0_25 = arith.constant 0 : index
      %40 = memref.load %arg7[%c0_25] : memref<1xf32, #tpu.memory_space<smem>>
      %41 = vector.broadcast %40 : f32 to vector<128x16xf32>
      %42 = arith.mulf %41, %39 : vector<128x16xf32>
      %c0_26 = arith.constant 0 : index
      %c0_27 = arith.constant 0 : index
      %c0_28 = arith.constant 0 : index
      %43 = vector.load %arg3[%c0_26, %c0_27, %c0_28] : memref<1x128x16xf32, #tpu.memory_space<vmem>>, vector<1x128x16xf32>
      %44 = vector.shape_cast %43 : vector<1x128x16xf32> to vector<128x16xf32>
      %45 = arith.addf %42, %44 : vector<128x16xf32>
      %c0_29 = arith.constant 0 : index
      %c0_30 = arith.constant 0 : index
      %c0_31 = arith.constant 0 : index
      %46 = vector.load %arg8[%c0_29, %c0_30, %c0_31] : memref<1x128x16xf32, #tpu.memory_space<vmem>>, vector<1x128x16xf32>
      %47 = vector.shape_cast %46 : vector<1x128x16xf32> to vector<128x16xf32>
      %48 = vector.shape_cast %45 : vector<128x16xf32> to vector<1x128x16xf32>
      tpu.vector_store %arg8[%c0_29, %c0_30, %c0_31], %48 {strides = array<i32>} : memref<1x128x16xf32, #tpu.memory_space<vmem>>, vector<1x128x16xf32>,
    } else {
    }
    return
  }
  func.func @transform_0(%arg0: i32, %arg1: i32, %arg2: i32) -> (i32, i32, i32) {
    %c0_i32 = arith.constant 0 : i32
    %c0_i32_0 = arith.constant 0 : i32
    return %arg0, %arg1, %c0_i32 : i32, i32, i32
  }
  func.func @transform_1(%arg0: i32, %arg1: i32, %arg2: i32) -> (i32, i32, i32) {
    %c0_i32 = arith.constant 0 : i32
    %c0_i32_0 = arith.constant 0 : i32
    return %arg0, %arg2, %c0_i32 : i32, i32, i32
  }
  func.func @transform_2(%arg0: i32, %arg1: i32, %arg2: i32) -> (i32, i32) {
    %c0_i32 = arith.constant 0 : i32
    %c0_i32_0 = arith.constant 0 : i32
    %c0_i32_1 = arith.constant 0 : i32
    return %c0_i32, %c0_i32_0 : i32, i32
  }
  func.func @transform_3(%arg0: i32, %arg1: i32, %arg2: i32) -> (i32, i32) {
    %c0_i32 = arith.constant 0 : i32
    %c0_i32_0 = arith.constant 0 : i32
    %c0_i32_1 = arith.constant 0 : i32
    return %c0_i32, %c0_i32_0 : i32, i32
  }
  func.func @transform_4(%arg0: i32, %arg1: i32, %arg2: i32) -> i32 {
    %c0_i32 = arith.constant 0 : i32
    %c0_i32_0 = arith.constant 0 : i32
    return %c0_i32 : i32
  }
  func.func @transform_5(%arg0: i32, %arg1: i32, %arg2: i32) -> (i32, i32, i32) {
    %c0_i32 = arith.constant 0 : i32
    %c0_i32_0 = arith.constant 0 : i32
    return %arg0, %arg1, %c0_i32 : i32, i32, i32
  }
}

</mosaic_0001>

<llo_original>
// kernel: pam_forward.1
$region0: #{pam_forward.1}
  #allocation0 [shape = 'u32[]', space=smem, size = 0x4, offset = 0x4, fixed_abs, tag = 'smem constant byte address 0x4 - core index']
  #allocation1 [shape = 'u32[144,128]{1,0:T(1,128)}', space=vmem, size = 0x12000, scoped, tag = 'internal scratch']
  #allocation2 [shape = 'bf16[128,128]{1,0:T(16,128)(2,1)}', space=vmem, size = 0x8000, scoped, tag = 'scratch operand']
  #allocation3 [shape = 'f32[128,1]{1,0:T(8,128)}', space=vmem, size = 0x10000, scoped, tag = 'scratch operand']
  #allocation4 [shape = 'f32[128,1]{1,0:T(8,128)}', space=vmem, size = 0x10000, scoped, tag = 'scratch operand']
  #allocation5 [shape = 'f32[128,16]{1,0:T(8,128)}', space=vmem, size = 0x10000, scoped, tag = 'scratch operand']
  #allocation6 [shape = 'f32[1]{0:T(128)S(6)}', space=smem, size = 0x200, scoped, tag = 'scoped memory for pam_forward.1']
  %s0 = inlined_call_operand.vmem [shape: f32[2,256,16], index: 0, kind: input, shape index: {}]
  %s1 = inlined_call_operand.vmem [shape: bf16[2,256,144], index: 1, kind: input, shape index: {}]
  %s2 = inlined_call_operand.vmem [shape: bf16[16,128], index: 2, kind: input, shape index: {}]
  %s3 = inlined_call_operand.vmem [shape: f32[1,128], index: 3, kind: input, shape index: {}]
  %s4 = inlined_call_operand.<no memory space> [shape: f32[1], index: 4, kind: input, shape index: {}]
  %s5 = inlined_call_operand.vmem [shape: f32[2,256,16], index: 5, kind: output, shape index: {}]
  %s6 = sld [smem:[#allocation0]]
  $region61: #{pam_forward.1} parent=0
    _
  %s8 = ssub.s32 1, %s6
  %s9 = scalar_select 0, %s8, %s6
  %10 = sst [smem:[#allocation6]] %s4
  loop: start=0, step=1, limit=10
  $region2: #{pam_forward.1} parent=0 // loop_pre_header
    _
  $region3: #{pam_forward.1} parent=0 // loop_header
    %s12 = sphi 0, %s16
    %p13 = scmp.ge.s32.totalorder %s12, 10
    %s19 = sphi 0, %s38
    %s20 = sphi 0, %s34
    %s21 = sphi 0, %s30
    %s22 = sphi 0, %s19
    %s23 = sphi 0, %s20
    %s24 = sphi 0, %s21
    %s25 = sphi 0, %s22
    %s26 = sphi 0, %s23
    %s27 = sphi 0, %s24
    %s43 = sphi 0, %s45
    %s46 = sphi 0, %s43
    %s47 = sphi 0, %s46
    %s63 = sphi 0, %s47
    %s71 = sphi 0, %s73
    %s74 = sphi 0, %s71
    %s75 = sphi 0, %s74
    %s91 = sphi 0, %s75
    %s95 = sphi 0, %s95
    %s97 = sphi 0, %s95
    %s98 = sphi 0, %s97
    %s112 = sphi 0, %s98
    %s116 = sphi 0, %s116
    %s118 = sphi 0, %s116
    %s119 = sphi 0, %s118
    %s133 = sphi 0, %s119
    %s137 = sphi 0, %s137
    %s139 = sphi 0, %s137
    %s140 = sphi 0, %s139
    %s154 = sphi 0, %s140
    %s162 = sphi 0, %s164
    %s165 = sphi 0, %s162
    %s166 = sphi 0, %s165
    %s182 = sphi 0, %s166
  $region4: #{pam_forward.1} parent=0 // loop_header_branch
    %15 = sbr.rel (%p13) target = $region8
  $region5: #{pam_forward.1} parent=0 // loop_body
    %s17 = ssub.s32 %s12, 1
    %s18 = ssub.s32 %s12, 2
    %s28 = sadd.s32 1, %s21
    %p29 = scmp.ge.s32.totalorder %s28, 2
    %s30 = scalar_select %p29, 0, %s28
    %s31 = sadd.s32 1, %s20
    %s32 = scalar_select %p29, %s31, %s20
    %p33 = scmp.ge.s32.totalorder %s32, 2
    %s34 = scalar_select %p33, 0, %s32
    %s35 = sadd.s32 1, %s19
    %s36 = scalar_select %p33, %s35, %s19
    %p37 = scmp.ge.s32.totalorder %s36, 2
    %s38 = scalar_select %p37, 0, %s36
    %s39 = ssub.s32 %s19, %s38
    %s40 = ssub.s32 %s20, %s34
    %s41 = sor.u32 %s39, %s40
    %p42 = scmp.eq.s32.totalorder %s41, 0
    %s44 = sadd.s32 %s43, 1
    %s45 = scalar_select %p42, %s43, %s44
    %p48 = pneg %p42
    %p49 = scmp.eq.s32.totalorder %s12, 7
    %p50 = por %p48, %p49
    %p51 = scmp.ne.s32.totalorder %s43, %s46
    %p52 = scmp.eq.s32.totalorder %s12, 0
    %p53 = por %p51, %p52
    %p54 = scmp.ne.s32.totalorder %s43, %s46
    %p55 = scmp.eq.s32.totalorder %s17, 7
    %p56 = por %p54, %p55
    %p57 = scmp.ne.s32.totalorder %s46, %s47
    %p58 = scmp.eq.s32.totalorder %s17, 0
    %p59 = por %p57, %p58
    %p60 = scmp.ne.s32.totalorder %s46, %s47
    %p61 = scmp.eq.s32.totalorder %s18, 7
    %p62 = por %p60, %p61
    %p64 = scmp.ne.s32.totalorder %s47, %s63
    %p65 = scmp.eq.s32.totalorder %s18, 0
    %p66 = por %p64, %p65
    %s67 = ssub.s32 %s19, %s38
    %s68 = ssub.s32 %s21, %s30
    %s69 = sor.u32 %s67, %s68
    %p70 = scmp.eq.s32.totalorder %s69, 0
    %s72 = sadd.s32 %s71, 1
    %s73 = scalar_select %p70, %s71, %s72
    %p76 = pneg %p70
    %p77 = scmp.eq.s32.totalorder %s12, 7
    %p78 = por %p76, %p77
    %p79 = scmp.ne.s32.totalorder %s71, %s74
    %p80 = scmp.eq.s32.totalorder %s12, 0
    %p81 = por %p79, %p80
    %p82 = scmp.ne.s32.totalorder %s71, %s74
    %p83 = scmp.eq.s32.totalorder %s17, 7
    %p84 = por %p82, %p83
    %p85 = scmp.ne.s32.totalorder %s74, %s75
    %p86 = scmp.eq.s32.totalorder %s17, 0
    %p87 = por %p85, %p86
    %p88 = scmp.ne.s32.totalorder %s74, %s75
    %p89 = scmp.eq.s32.totalorder %s18, 7
    %p90 = por %p88, %p89
    %p92 = scmp.ne.s32.totalorder %s75, %s91
    %p93 = scmp.eq.s32.totalorder %s18, 0
    %p94 = por %p92, %p93
    %s96 = sadd.s32 %s95, 1
    %p99 = scmp.eq.s32.totalorder %s12, 7
    %p100 = scmp.ne.s32.totalorder %s95, %s97
    %p101 = scmp.eq.s32.totalorder %s12, 0
    %p102 = por %p100, %p101
    %p103 = scmp.ne.s32.totalorder %s95, %s97
    %p104 = scmp.eq.s32.totalorder %s17, 7
    %p105 = por %p103, %p104
    %p106 = scmp.ne.s32.totalorder %s97, %s98
    %p107 = scmp.eq.s32.totalorder %s17, 0
    %p108 = por %p106, %p107
    %p109 = scmp.ne.s32.totalorder %s97, %s98
    %p110 = scmp.eq.s32.totalorder %s18, 7
    %p111 = por %p109, %p110
    %p113 = scmp.ne.s32.totalorder %s98, %s112
    %p114 = scmp.eq.s32.totalorder %s18, 0
    %p115 = por %p113, %p114
    %s117 = sadd.s32 %s116, 1
    %p120 = scmp.eq.s32.totalorder %s12, 7
    %p121 = scmp.ne.s32.totalorder %s116, %s118
    %p122 = scmp.eq.s32.totalorder %s12, 0
    %p123 = por %p121, %p122
    %p124 = scmp.ne.s32.totalorder %s116, %s118
    %p125 = scmp.eq.s32.totalorder %s17, 7
    %p126 = por %p124, %p125
    %p127 = scmp.ne.s32.totalorder %s118, %s119
    %p128 = scmp.eq.s32.totalorder %s17, 0
    %p129 = por %p127, %p128
    %p130 = scmp.ne.s32.totalorder %s118, %s119
    %p131 = scmp.eq.s32.totalorder %s18, 7
    %p132 = por %p130, %p131
    %p134 = scmp.ne.s32.totalorder %s119, %s133
    %p135 = scmp.eq.s32.totalorder %s18, 0
    %p136 = por %p134, %p135
    %s138 = sadd.s32 %s137, 1
    %p141 = scmp.eq.s32.totalorder %s12, 7
    %p142 = scmp.ne.s32.totalorder %s137, %s139
    %p143 = scmp.eq.s32.totalorder %s12, 0
    %p144 = por %p142, %p143
    %p145 = scmp.ne.s32.totalorder %s137, %s139
    %p146 = scmp.eq.s32.totalorder %s17, 7
    %p147 = por %p145, %p146
    %p148 = scmp.ne.s32.totalorder %s139, %s140
    %p149 = scmp.eq.s32.totalorder %s17, 0
    %p150 = por %p148, %p149
    %p151 = scmp.ne.s32.totalorder %s139, %s140
    %p152 = scmp.eq.s32.totalorder %s18, 7
    %p153 = por %p151, %p152
    %p155 = scmp.ne.s32.totalorder %s140, %s154
    %p156 = scmp.eq.s32.totalorder %s18, 0
    %p157 = por %p155, %p156
    %s158 = ssub.s32 %s19, %s38
    %s159 = ssub.s32 %s20, %s34
    %s160 = sor.u32 %s158, %s159
    %p161 = scmp.eq.s32.totalorder %s160, 0
    %s163 = sadd.s32 %s162, 1
    %s164 = scalar_select %p161, %s162, %s163
    %p167 = pneg %p161
    %p168 = scmp.eq.s32.totalorder %s12, 7
    %p169 = por %p167, %p168
    %p170 = scmp.ne.s32.totalorder %s162, %s165
    %p171 = scmp.eq.s32.totalorder %s12, 0
    %p172 = por %p170, %p171
    %p173 = scmp.ne.s32.totalorder %s162, %s165
    %p174 = scmp.eq.s32.totalorder %s17, 7
    %p175 = por %p173, %p174
    %p176 = scmp.ne.s32.totalorder %s165, %s166
    %p177 = scmp.eq.s32.totalorder %s17, 0
    %p178 = por %p176, %p177
    %p179 = scmp.ne.s32.totalorder %s165, %s166
    %p180 = scmp.eq.s32.totalorder %s18, 7
    %p181 = por %p179, %p180
    %p183 = scmp.ne.s32.totalorder %s166, %s182
    %p184 = scmp.eq.s32.totalorder %s18, 0
    %p185 = por %p183, %p184
    %p186 = scmp.le.s32.totalorder 1, %s12
    %p187 = scmp.lt.s32.totalorder %s12, 9
    %p188 = pnand %p186, %p187
    %p189 = pneg %p188
    // Predicated region
    $region9: #{pam_forward.1} parent=5 // pred_check
      _
    $region10: #{pam_forward.1} parent=5 // pred_check_branch
      %191 = sbr.rel (%p188) target = $region12
    $region11: #{pam_forward.1} parent=5 // pred_region
      %s192 = ssub.s32 %s12, 1
      // Predicated region
      $region13: #{pam_forward.1} parent=11 // pred_check
        %p193 = pneg %p108
      $region14: #{pam_forward.1} parent=11 // pred_check_branch
        %195 = sbr.rel (%p193) target = $region16
      $region15: #{pam_forward.1} parent=11 // pred_region
        _
      $region16: #{pam_forward.1} parent=11 // pred_fallthru
        _
      // Predicated region
      $region17: #{pam_forward.1} parent=11 // pred_check
        %p196 = pneg %p129
      $region18: #{pam_forward.1} parent=11 // pred_check_branch
        %198 = sbr.rel (%p196) target = $region20
      $region19: #{pam_forward.1} parent=11 // pred_region
        _
      $region20: #{pam_forward.1} parent=11 // pred_fallthru
        _
      // Predicated region
      $region21: #{pam_forward.1} parent=11 // pred_check
        %p199 = pneg %p150
      $region22: #{pam_forward.1} parent=11 // pred_check_branch
        %201 = sbr.rel (%p199) target = $region24
      $region23: #{pam_forward.1} parent=11 // pred_region
        _
      $region24: #{pam_forward.1} parent=11 // pred_fallthru
        _
    $region12: #{pam_forward.1} parent=5 // pred_fallthru
      _
    %p202 = scmp.lt.s32.totalorder %s12, 8
    // Predicated region
    $region25: #{pam_forward.1} parent=5 // pred_check
      %p203 = pneg %p202
    $region26: #{pam_forward.1} parent=5 // pred_check_branch
      %205 = sbr.rel (%p203) target = $region28
    $region27: #{pam_forward.1} parent=5 // pred_region
      // Predicated region
      $region29: #{pam_forward.1} parent=27 // pred_check
        %p206 = pneg %p53
      $region30: #{pam_forward.1} parent=27 // pred_check_branch
        %208 = sbr.rel (%p206) target = $region32
      $region31: #{pam_forward.1} parent=27 // pred_region
        %s209 = smul.u32 16, %s20
        %p210 = scmp.lt.s32.totalorder %s19, 1
        %s211 = scalar_select %p210, %s19, 1
        %p212 = scmp.lt.s32.totalorder %s209, 31
        %s213 = scalar_select %p212, %s209, 31
        %s214 = smul.addr %s211, 32
        %s215 = sadd.s32 %s213, %s214
        %s216 = smul.addr %s215, 8
        %s217 = scalar_lea.vmem %s0, %s216
        %s218 = smul.u32 16, %s20
      $region32: #{pam_forward.1} parent=27 // pred_fallthru
        _
      // Predicated region
      $region33: #{pam_forward.1} parent=27 // pred_check
        %p219 = pneg %p81
      $region34: #{pam_forward.1} parent=27 // pred_check_branch
        %221 = sbr.rel (%p219) target = $region36
      $region35: #{pam_forward.1} parent=27 // pred_region
        %s222 = smul.u32 16, %s21
        %p223 = scmp.lt.s32.totalorder %s19, 1
        %s224 = scalar_select %p223, %s19, 1
        %p225 = scmp.lt.s32.totalorder %s222, 31
        %s226 = scalar_select %p225, %s222, 31
        %s227 = smul.addr %s226, 2
        %s228 = smul.addr %s224, 64
        %s229 = sadd.s32 %s227, %s228
        %s230 = smul.addr %s229, 4
        %s231 = scalar_lea.vmem %s1, %s230
        %s232 = smul.u32 16, %s21
      $region36: #{pam_forward.1} parent=27 // pred_fallthru
        _
    $region28: #{pam_forward.1} parent=5 // pred_fallthru
      _
    %p233 = scmp.le.s32.totalorder 1, %s12
    %p234 = scmp.lt.s32.totalorder %s12, 9
    %p235 = pnand %p233, %p234
    %p236 = pneg %p235
    // Predicated region
    $region37: #{pam_forward.1} parent=5 // pred_check
      _
    $region38: #{pam_forward.1} parent=5 // pred_check_branch
      %238 = sbr.rel (%p235) target = $region40
    $region39: #{pam_forward.1} parent=5 // pred_region
      %s239 = ssub.s32 %s12, 1
      %s240 = smul.u32 16, %s23
      %p241 = scmp.lt.s32.totalorder %s22, 1
      %s242 = scalar_select %p241, %s22, 1
      %p243 = scmp.lt.s32.totalorder %s240, 31
      %s244 = scalar_select %p243, %s240, 31
      %s245 = smul.addr %s242, 32
      %s246 = sadd.s32 %s244, %s245
      %s247 = smul.addr %s246, 8
      %s248 = scalar_lea.vmem %s0, %s247
      %p249 = pneg %p59
      %p250 = pneg %p56
      %s251 = smul.u32 16, %s24
      %p252 = scmp.lt.s32.totalorder %s22, 1
      %s253 = scalar_select %p252, %s22, 1
      %p254 = scmp.lt.s32.totalorder %s251, 31
      %s255 = scalar_select %p254, %s251, 31
      %s256 = smul.addr %s255, 2
      %s257 = smul.addr %s253, 64
      %s258 = sadd.s32 %s256, %s257
      %s259 = smul.addr %s258, 4
      %s260 = scalar_lea.vmem %s1, %s259
      %p261 = pneg %p87
      %p262 = pneg %p84
      %p263 = pneg %p108
      %p264 = pneg %p105
      %p265 = pneg %p129
      %p266 = pneg %p126
      %p267 = pneg %p150
      %p268 = pneg %p147
      %p269 = pneg %p178
      %p270 = pneg %p175
      %s271 = smul.u32 16, %s23
      %p272 = scmp.lt.s32.totalorder %s22, 1
      %s273 = scalar_select %p272, %s22, 1
      %p274 = scmp.lt.s32.totalorder %s271, 31
      %s275 = scalar_select %p274, %s271, 31
      %s276 = smul.addr %s273, 32
      %s277 = sadd.s32 %s275, %s276
      %s278 = smul.addr %s277, 8
      %s279 = scalar_lea.vmem %s5, %s278
      %s280 = smul.u32 16, %s23
      %p281 = scmp.lt.s32.totalorder %s22, 1
      %s282 = scalar_select %p281, %s22, 1
      %p283 = scmp.lt.s32.totalorder %s280, 31
      %s284 = scalar_select %p283, %s280, 31
      %s285 = smul.addr %s282, 32
      %s286 = sadd.s32 %s284, %s285
      %s287 = smul.addr %s286, 8
      %s288 = scalar_lea.vmem %s0, %s287
      %s289 = smul.u32 16, %s23
      %s290 = smul.u32 16, %s24
      %p291 = scmp.lt.s32.totalorder %s22, 1
      %s292 = scalar_select %p291, %s22, 1
      %p293 = scmp.lt.s32.totalorder %s290, 31
      %s294 = scalar_select %p293, %s290, 31
      %s295 = smul.addr %s294, 2
      %s296 = smul.addr %s292, 64
      %s297 = sadd.s32 %s295, %s296
      %s298 = smul.addr %s297, 4
      %s299 = scalar_lea.vmem %s1, %s298
      %s300 = smul.u32 16, %s24
      %s301 = smul.u32 16, %s23
      %p302 = scmp.lt.s32.totalorder %s22, 1
      %s303 = scalar_select %p302, %s22, 1
      %p304 = scmp.lt.s32.totalorder %s301, 31
      %s305 = scalar_select %p304, %s301, 31
      %s306 = smul.addr %s303, 32
      %s307 = sadd.s32 %s305, %s306
      %s308 = smul.addr %s307, 8
      %s309 = scalar_lea.vmem %s5, %s308
      %s310 = smul.u32 16, %s23
      %p312 = scmp.eq.s32.totalorder %s24, 0
      // Predicated region
      $region41: #{pam_forward.1} parent=39 // pred_check
        %p313 = pneg %p312
      $region42: #{pam_forward.1} parent=39 // pred_check_branch
        %315 = sbr.rel (%p313) target = $region44
      $region43: #{pam_forward.1} parent=39 // pred_region
        %v316 = vld [vmem:[%s288] sm:$0xff]
        %v317 = vld [vmem:[%s288 + $0x8] sm:$0xff]
        %v318 = vld [vmem:[%s288 + $0x10] sm:$0xff]
        %v319 = vld [vmem:[%s288 + $0x18] sm:$0xff]
        %v320 = vld [vmem:[%s288 + $0x20] sm:$0xff]
        %v321 = vld [vmem:[%s288 + $0x28] sm:$0xff]
        %v322 = vld [vmem:[%s288 + $0x30] sm:$0xff]
        %v323 = vld [vmem:[%s288 + $0x38] sm:$0xff]
        %v324 = vld [vmem:[%s288 + $0x40] sm:$0xff]
        %v325 = vld [vmem:[%s288 + $0x48] sm:$0xff]
        %v326 = vld [vmem:[%s288 + $0x50] sm:$0xff]
        %v327 = vld [vmem:[%s288 + $0x58] sm:$0xff]
        %v328 = vld [vmem:[%s288 + $0x60] sm:$0xff]
        %v329 = vld [vmem:[%s288 + $0x68] sm:$0xff]
        %v330 = vld [vmem:[%s288 + $0x70] sm:$0xff]
        %v331 = vld [vmem:[%s288 + $0x78] sm:$0xff]
        %v332 = vpack.c.bf16 %v317, %v316
        %v333 = vpack.c.bf16 %v319, %v318
        %v334 = vpack.c.bf16 %v321, %v320
        %v335 = vpack.c.bf16 %v323, %v322
        %v336 = vpack.c.bf16 %v325, %v324
        %v337 = vpack.c.bf16 %v327, %v326
        %v338 = vpack.c.bf16 %v329, %v328
        %v339 = vpack.c.bf16 %v331, %v330
        %v340 = vld [vmem:[%s2] sm:$0xf]
        %v341 = vld [vmem:[%s2 + $0x4] sm:$0xf]
        %v342 = vld [vmem:[%s3] sm:$0x1]
        %v344 = vlaneseq
        %v345 = vshrl.u32 %v344, 7
        %v346 = vsub.s32 0, %v345
        %v347 = vrot.slane %v342, %v346
        %v351 = vunpack.c.l.b16 %v340
        %v352 = vunpack.c.l.b16 %v341
        %v353 = vpack.c.b16 %v352, %v351
        %vm355 = vcmask 130048
        %v357 = vsel %vm355, %v332, 0
        %v360 = vsel %vm355, %v333, 0
        %v363 = vsel %vm355, %v334, 0
        %v366 = vsel %vm355, %v335, 0
        %v369 = vsel %vm355, %v336, 0
        %v372 = vsel %vm355, %v337, 0
        %v375 = vsel %vm355, %v338, 0
        %v378 = vsel %vm355, %v339, 0
        %380 = vmatprep.subr.bf16.mxu0 0
        %381 = vmatpush1.bf16.msra.mxu0 %v353
        %382 = vmatprep.subr.bf16.mxu0 0
        %383 = vmatpush1.bf16.msra.mxu0 0
        %384 = vmatprep.subr.bf16.mxu0 0
        %385 = vmatpush1.bf16.msra.mxu0 0
        %386 = vmatprep.subr.bf16.mxu0 0
        %387 = vmatpush1.bf16.msra.mxu0 0
        %388 = vmatprep.subr.bf16.mxu0 0
        %389 = vmatpush1.bf16.msra.mxu0 0
        %390 = vmatprep.subr.bf16.mxu0 0
        %391 = vmatpush1.bf16.msra.mxu0 0
        %392 = vmatprep.subr.bf16.mxu0 0
        %393 = vmatpush1.bf16.msra.mxu0 0
        %394 = vmatprep.subr.bf16.mxu0 0
        %395 = vmatpush1.bf16.msra.mxu0 0
        %396 = vmatprep.subr.bf16.mxu0 0
        %397 = vmatpush1.bf16.msra.mxu0 0
        %398 = vmatprep.subr.bf16.mxu0 0
        %399 = vmatpush1.bf16.msra.mxu0 0
        %400 = vmatprep.subr.bf16.mxu0 0
        %401 = vmatpush1.bf16.msra.mxu0 0
        %402 = vmatprep.subr.bf16.mxu0 0
        %403 = vmatpush1.bf16.msra.mxu0 0
        %404 = vmatprep.subr.bf16.mxu0 0
        %405 = vmatpush1.bf16.msra.mxu0 0
        %406 = vmatprep.subr.bf16.mxu0 0
        %407 = vmatpush1.bf16.msra.mxu0 0
        %408 = vmatprep.subr.bf16.mxu0 0
        %409 = vmatpush1.bf16.msra.mxu0 0
        %410 = vmatprep.subr.bf16.mxu0 0
        %411 = vmatpush1.bf16.msra.mxu0 0
        %412 = vmatprep.mubr.bf16.mxu0 0
        %413 = vmatmul.mubr.bf16.gmra.mrb[0].mxu0 %v357
        %v414 = vpop.f32.mrb[0].mxu0
        %v415 = vadd.f32 %v347, %v414
        %v416 = vpop.f32.mrb[0].mxu0
        %v417 = vpop.f32.mrb[0].mxu0
        %v418 = vadd.f32 %v347, %v417
        %v419 = vpop.f32.mrb[0].mxu0
        %420 = vmatprep.mubr.bf16.mxu0 0
        %421 = vmatmul.mubr.bf16.gmra.mrb[0].mxu0 %v360
        %v422 = vpop.f32.mrb[0].mxu0
        %v423 = vadd.f32 %v347, %v422
        %v424 = vpop.f32.mrb[0].mxu0
        %v425 = vpop.f32.mrb[0].mxu0
        %v426 = vadd.f32 %v347, %v425
        %v427 = vpop.f32.mrb[0].mxu0
        %428 = vmatprep.mubr.bf16.mxu0 0
        %429 = vmatmul.mubr.bf16.gmra.mrb[0].mxu0 %v363
        %v430 = vpop.f32.mrb[0].mxu0
        %v431 = vadd.f32 %v347, %v430
        %v432 = vpop.f32.mrb[0].mxu0
        %v433 = vpop.f32.mrb[0].mxu0
        %v434 = vadd.f32 %v347, %v433
        %v435 = vpop.f32.mrb[0].mxu0
        %436 = vmatprep.mubr.bf16.mxu0 0
        %437 = vmatmul.mubr.bf16.gmra.mrb[0].mxu0 %v366
        %v438 = vpop.f32.mrb[0].mxu0
        %v439 = vadd.f32 %v347, %v438
        %v440 = vpop.f32.mrb[0].mxu0
        %v441 = vpop.f32.mrb[0].mxu0
        %v442 = vadd.f32 %v347, %v441
        %v443 = vpop.f32.mrb[0].mxu0
        %444 = vmatprep.mubr.bf16.mxu0 0
        %445 = vmatmul.mubr.bf16.gmra.mrb[0].mxu0 %v369
        %v446 = vpop.f32.mrb[0].mxu0
        %v447 = vadd.f32 %v347, %v446
        %v448 = vpop.f32.mrb[0].mxu0
        %v449 = vpop.f32.mrb[0].mxu0
        %v450 = vadd.f32 %v347, %v449
        %v451 = vpop.f32.mrb[0].mxu0
        %452 = vmatprep.mubr.bf16.mxu0 0
        %453 = vmatmul.mubr.bf16.gmra.mrb[0].mxu0 %v372
        %v454 = vpop.f32.mrb[0].mxu0
        %v455 = vadd.f32 %v347, %v454
        %v456 = vpop.f32.mrb[0].mxu0
        %v457 = vpop.f32.mrb[0].mxu0
        %v458 = vadd.f32 %v347, %v457
        %v459 = vpop.f32.mrb[0].mxu0
        %460 = vmatprep.mubr.bf16.mxu0 0
        %461 = vmatmul.mubr.bf16.gmra.mrb[0].mxu0 %v375
        %v462 = vpop.f32.mrb[0].mxu0
        %v463 = vadd.f32 %v347, %v462
        %v464 = vpop.f32.mrb[0].mxu0
        %v465 = vpop.f32.mrb[0].mxu0
        %v466 = vadd.f32 %v347, %v465
        %v467 = vpop.f32.mrb[0].mxu0
        %468 = vmatprep.mubr.bf16.mxu0 0
        %469 = vmatmul.mubr.bf16.gmra.mrb[0].mxu0 %v378
        %v470 = vpop.f32.mrb[0].mxu0
        %v471 = vadd.f32 %v347, %v470
        %v472 = vpop.f32.mrb[0].mxu0
        %v473 = vpop.f32.mrb[0].mxu0
        %v474 = vadd.f32 %v347, %v473
        %v475 = vpop.f32.mrb[0].mxu0
        %476 = vdwg.mxu0
        %v477 = vpack.c.bf16 %v418, %v415
        %v478 = vpack.c.bf16 %v426, %v423
        %v479 = vpack.c.bf16 %v434, %v431
        %v480 = vpack.c.bf16 %v442, %v439
        %v481 = vpack.c.bf16 %v450, %v447
        %v482 = vpack.c.bf16 %v458, %v455
        %v483 = vpack.c.bf16 %v466, %v463
        %v484 = vpack.c.bf16 %v474, %v471
        %485 = vst [vmem:[#allocation2] sm:$0xff] %v477
        %486 = vst [vmem:[#allocation2 + $0x8] sm:$0xff] %v478
        %487 = vst [vmem:[#allocation2 + $0x10] sm:$0xff] %v479
        %488 = vst [vmem:[#allocation2 + $0x18] sm:$0xff] %v480
        %489 = vst [vmem:[#allocation2 + $0x20] sm:$0xff] %v481
        %490 = vst [vmem:[#allocation2 + $0x28] sm:$0xff] %v482
        %491 = vst [vmem:[#allocation2 + $0x30] sm:$0xff] %v483
        %492 = vst [vmem:[#allocation2 + $0x38] sm:$0xff] %v484
        %vm493 = vcmask 7168
        %494 = vst.msk [vmem:[#allocation3] sm:$0xff] %vm493, -inf
        %495 = vst.msk [vmem:[#allocation3 + $0x8] sm:$0xff] %vm493, -inf
        %496 = vst.msk [vmem:[#allocation3 + $0x10] sm:$0xff] %vm493, -inf
        %497 = vst.msk [vmem:[#allocation3 + $0x18] sm:$0xff] %vm493, -inf
        %498 = vst.msk [vmem:[#allocation3 + $0x20] sm:$0xff] %vm493, -inf
        %499 = vst.msk [vmem:[#allocation3 + $0x28] sm:$0xff] %vm493, -inf
        %500 = vst.msk [vmem:[#allocation3 + $0x30] sm:$0xff] %vm493, -inf
        %501 = vst.msk [vmem:[#allocation3 + $0x38] sm:$0xff] %vm493, -inf
        %502 = vst.msk [vmem:[#allocation3 + $0x40] sm:$0xff] %vm493, -inf
        %503 = vst.msk [vmem:[#allocation3 + $0x48] sm:$0xff] %vm493, -inf
        %504 = vst.msk [vmem:[#allocation3 + $0x50] sm:$0xff] %vm493, -inf
        %505 = vst.msk [vmem:[#allocation3 + $0x58] sm:$0xff] %vm493, -inf
        %506 = vst.msk [vmem:[#allocation3 + $0x60] sm:$0xff] %vm493, -inf
        %507 = vst.msk [vmem:[#allocation3 + $0x68] sm:$0xff] %vm493, -inf
        %508 = vst.msk [vmem:[#allocation3 + $0x70] sm:$0xff] %vm493, -inf
        %509 = vst.msk [vmem:[#allocation3 + $0x78] sm:$0xff] %vm493, -inf
        %510 = vst.msk [vmem:[#allocation4] sm:$0xff] %vm493, 0.0
        %511 = vst.msk [vmem:[#allocation4 + $0x8] sm:$0xff] %vm493, 0.0
        %512 = vst.msk [vmem:[#allocation4 + $0x10] sm:$0xff] %vm493, 0.0
        %513 = vst.msk [vmem:[#allocation4 + $0x18] sm:$0xff] %vm493, 0.0
        %514 = vst.msk [vmem:[#allocation4 + $0x20] sm:$0xff] %vm493, 0.0
        %515 = vst.msk [vmem:[#allocation4 + $0x28] sm:$0xff] %vm493, 0.0
        %516 = vst.msk [vmem:[#allocation4 + $0x30] sm:$0xff] %vm493, 0.0
        %517 = vst.msk [vmem:[#allocation4 + $0x38] sm:$0xff] %vm493, 0.0
        %518 = vst.msk [vmem:[#allocation4 + $0x40] sm:$0xff] %vm493, 0.0
        %519 = vst.msk [vmem:[#allocation4 + $0x48] sm:$0xff] %vm493, 0.0
        %520 = vst.msk [vmem:[#allocation4 + $0x50] sm:$0xff] %vm493, 0.0
        %521 = vst.msk [vmem:[#allocation4 + $0x58] sm:$0xff] %vm493, 0.0
        %522 = vst.msk [vmem:[#allocation4 + $0x60] sm:$0xff] %vm493, 0.0
        %523 = vst.msk [vmem:[#allocation4 + $0x68] sm:$0xff] %vm493, 0.0
        %524 = vst.msk [vmem:[#allocation4 + $0x70] sm:$0xff] %vm493, 0.0
        %525 = vst.msk [vmem:[#allocation4 + $0x78] sm:$0xff] %vm493, 0.0
        %526 = vst.msk [vmem:[#allocation5] sm:$0xff] %vm355, 0.0
        %527 = vst.msk [vmem:[#allocation5 + $0x8] sm:$0xff] %vm355, 0.0
        %528 = vst.msk [vmem:[#allocation5 + $0x10] sm:$0xff] %vm355, 0.0
        %529 = vst.msk [vmem:[#allocation5 + $0x18] sm:$0xff] %vm355, 0.0
        %530 = vst.msk [vmem:[#allocation5 + $0x20] sm:$0xff] %vm355, 0.0
        %531 = vst.msk [vmem:[#allocation5 + $0x28] sm:$0xff] %vm355, 0.0
        %532 = vst.msk [vmem:[#allocation5 + $0x30] sm:$0xff] %vm355, 0.0
        %533 = vst.msk [vmem:[#allocation5 + $0x38] sm:$0xff] %vm355, 0.0
        %534 = vst.msk [vmem:[#allocation5 + $0x40] sm:$0xff] %vm355, 0.0
        %535 = vst.msk [vmem:[#allocation5 + $0x48] sm:$0xff] %vm355, 0.0
        %536 = vst.msk [vmem:[#allocation5 + $0x50] sm:$0xff] %vm355, 0.0
        %537 = vst.msk [vmem:[#allocation5 + $0x58] sm:$0xff] %vm355, 0.0
        %538 = vst.msk [vmem:[#allocation5 + $0x60] sm:$0xff] %vm355, 0.0
        %539 = vst.msk [vmem:[#allocation5 + $0x68] sm:$0xff] %vm355, 0.0
        %540 = vst.msk [vmem:[#allocation5 + $0x70] sm:$0xff] %vm355, 0.0
        %541 = vst.msk [vmem:[#allocation5 + $0x78] sm:$0xff] %vm355, 0.0
      $region44: #{pam_forward.1} parent=39 // pred_fallthru
        _
      %v542 = vld [vmem:[%s299] sm:$0xff]
      %v543 = vld [vmem:[%s299 + $0x8] sm:$0xff]
      %v544 = vld [vmem:[%s299 + $0x10] sm:$0xff]
      %v545 = vld [vmem:[%s299 + $0x18] sm:$0xff]
      %v546 = vld [vmem:[%s299 + $0x20] sm:$0xff]
      %v547 = vld [vmem:[%s299 + $0x28] sm:$0xff]
      %v548 = vld [vmem:[%s299 + $0x30] sm:$0xff]
      %v549 = vld [vmem:[%s299 + $0x38] sm:$0xff]
      %v550 = vld [vmem:[%s299 + $0x40] sm:$0xff]
      %v551 = vld [vmem:[%s299 + $0x48] sm:$0xff]
      %v552 = vld [vmem:[%s299 + $0x50] sm:$0xff]
      %v553 = vld [vmem:[%s299 + $0x58] sm:$0xff]
      %v554 = vld [vmem:[%s299 + $0x60] sm:$0xff]
      %v555 = vld [vmem:[%s299 + $0x68] sm:$0xff]
      %v556 = vld [vmem:[%s299 + $0x70] sm:$0xff]
      %v557 = vld [vmem:[%s299 + $0x78] sm:$0xff]
      %v558 = vld [vmem:[#allocation2] sm:$0xff]
      %v559 = vld [vmem:[#allocation2 + $0x8] sm:$0xff]
      %v560 = vld [vmem:[#allocation2 + $0x10] sm:$0xff]
      %v561 = vld [vmem:[#allocation2 + $0x18] sm:$0xff]
      %v562 = vld [vmem:[#allocation2 + $0x20] sm:$0xff]
      %v563 = vld [vmem:[#allocation2 + $0x28] sm:$0xff]
      %v564 = vld [vmem:[#allocation2 + $0x30] sm:$0xff]
      %v565 = vld [vmem:[#allocation2 + $0x38] sm:$0xff]
      %v582 = vunpack.c.l.b16 %v542
      %v583 = vunpack.c.l.b16 %v543
      %v584 = vunpack.c.l.b16 %v544
      %v585 = vunpack.c.l.b16 %v545
      %v586 = vunpack.c.l.b16 %v546
      %v587 = vunpack.c.l.b16 %v547
      %v588 = vunpack.c.l.b16 %v548
      %v589 = vunpack.c.l.b16 %v549
      %v590 = vunpack.c.l.b16 %v550
      %v591 = vunpack.c.l.b16 %v551
      %v592 = vunpack.c.l.b16 %v552
      %v593 = vunpack.c.l.b16 %v553
      %v594 = vunpack.c.l.b16 %v554
      %v595 = vunpack.c.l.b16 %v555
      %v596 = vunpack.c.l.b16 %v556
      %v597 = vunpack.c.l.b16 %v557
      %v598 = vpack.c.b16 %v583, %v582
      %v599 = vpack.c.b16 %v585, %v584
      %v600 = vpack.c.b16 %v587, %v586
      %v601 = vpack.c.b16 %v589, %v588
      %v602 = vpack.c.b16 %v591, %v590
      %v603 = vpack.c.b16 %v593, %v592
      %v604 = vpack.c.b16 %v595, %v594
      %v605 = vpack.c.b16 %v597, %v596
      %614 = vmatprep.subr.bf16.mxu0 0
      %615 = vmatpush1.bf16.xpose.msra.mxu0 %v598
      %616 = vmatprep.subr.bf16.mxu0 0
      %617 = vmatpush1.bf16.xpose.msra.mxu0 %v599
      %618 = vmatprep.subr.bf16.mxu0 0
      %619 = vmatpush1.bf16.xpose.msra.mxu0 %v600
      %620 = vmatprep.subr.bf16.mxu0 0
      %621 = vmatpush1.bf16.xpose.msra.mxu0 %v601
      %622 = vmatprep.subr.bf16.mxu0 0
      %623 = vmatpush1.bf16.xpose.msra.mxu0 %v602
      %624 = vmatprep.subr.bf16.mxu0 0
      %625 = vmatpush1.bf16.xpose.msra.mxu0 %v603
      %626 = vmatprep.subr.bf16.mxu0 0
      %627 = vmatpush1.bf16.xpose.msra.mxu0 %v604
      %628 = vmatprep.subr.bf16.mxu0 0
      %629 = vmatpush1.bf16.xpose.msra.mxu0 %v605
      %630 = vmatprep.subr.bf16.mxu0 0
      %631 = vmatpush1.bf16.xpose.msra.mxu0 0
      %632 = vmatprep.subr.bf16.mxu0 0
      %633 = vmatpush1.bf16.xpose.msra.mxu0 0
      %634 = vmatprep.subr.bf16.mxu0 0
      %635 = vmatpush1.bf16.xpose.msra.mxu0 0
      %636 = vmatprep.subr.bf16.mxu0 0
      %637 = vmatpush1.bf16.xpose.msra.mxu0 0
      %638 = vmatprep.subr.bf16.mxu0 0
      %639 = vmatpush1.bf16.xpose.msra.mxu0 0
      %640 = vmatprep.subr.bf16.mxu0 0
      %641 = vmatpush1.bf16.xpose.msra.mxu0 0
      %642 = vmatprep.subr.bf16.mxu0 0
      %643 = vmatpush1.bf16.xpose.msra.mxu0 0
      %644 = vmatprep.subr.bf16.mxu0 0
      %645 = vmatpush1.bf16.xpose.msra.mxu0 0
      %646 = vmatprep.mubr.bf16.mxu0 0
      %647 = vmatmul.mubr.bf16.gmra.mrb[0].mxu0 %v558
      %v648 = vpop.f32.mrb[0].mxu0
      %v649 = vadd.f32 0.0, %v648
      %v650 = vpop.f32.mrb[0].mxu0
      %v651 = vpop.f32.mrb[0].mxu0
      %v652 = vadd.f32 0.0, %v651
      %v653 = vpop.f32.mrb[0].mxu0
      %654 = vmatprep.mubr.bf16.mxu0 0
      %655 = vmatmul.mubr.bf16.gmra.mrb[0].mxu0 %v559
      %v656 = vpop.f32.mrb[0].mxu0
      %v657 = vadd.f32 0.0, %v656
      %v658 = vpop.f32.mrb[0].mxu0
      %v659 = vpop.f32.mrb[0].mxu0
      %v660 = vadd.f32 0.0, %v659
      %v661 = vpop.f32.mrb[0].mxu0
      %662 = vmatprep.mubr.bf16.mxu0 0
      %663 = vmatmul.mubr.bf16.gmra.mrb[0].mxu0 %v560
      %v664 = vpop.f32.mrb[0].mxu0
      %v665 = vadd.f32 0.0, %v664
      %v666 = vpop.f32.mrb[0].mxu0
      %v667 = vpop.f32.mrb[0].mxu0
      %v668 = vadd.f32 0.0, %v667
      %v669 = vpop.f32.mrb[0].mxu0
      %670 = vmatprep.mubr.bf16.mxu0 0
      %671 = vmatmul.mubr.bf16.gmra.mrb[0].mxu0 %v561
      %v672 = vpop.f32.mrb[0].mxu0
      %v673 = vadd.f32 0.0, %v672
      %v674 = vpop.f32.mrb[0].mxu0
      %v675 = vpop.f32.mrb[0].mxu0
      %v676 = vadd.f32 0.0, %v675
      %v677 = vpop.f32.mrb[0].mxu0
      %678 = vmatprep.mubr.bf16.mxu0 0
      %679 = vmatmul.mubr.bf16.gmra.mrb[0].mxu0 %v562
      %v680 = vpop.f32.mrb[0].mxu0
      %v681 = vadd.f32 0.0, %v680
      %v682 = vpop.f32.mrb[0].mxu0
      %v683 = vpop.f32.mrb[0].mxu0
      %v684 = vadd.f32 0.0, %v683
      %v685 = vpop.f32.mrb[0].mxu0
      %686 = vmatprep.mubr.bf16.mxu0 0
      %687 = vmatmul.mubr.bf16.gmra.mrb[0].mxu0 %v563
      %v688 = vpop.f32.mrb[0].mxu0
      %v689 = vadd.f32 0.0, %v688
      %v690 = vpop.f32.mrb[0].mxu0
      %v691 = vpop.f32.mrb[0].mxu0
      %v692 = vadd.f32 0.0, %v691
      %v693 = vpop.f32.mrb[0].mxu0
      %694 = vmatprep.mubr.bf16.mxu0 0
      %695 = vmatmul.mubr.bf16.gmra.mrb[0].mxu0 %v564
      %v696 = vpop.f32.mrb[0].mxu0
      %v697 = vadd.f32 0.0, %v696
      %v698 = vpop.f32.mrb[0].mxu0
      %v699 = vpop.f32.mrb[0].mxu0
      %v700 = vadd.f32 0.0, %v699
      %v701 = vpop.f32.mrb[0].mxu0
      %702 = vmatprep.mubr.bf16.mxu0 0
      %703 = vmatmul.mubr.bf16.gmra.mrb[0].mxu0 %v565
      %v704 = vpop.f32.mrb[0].mxu0
      %v705 = vadd.f32 0.0, %v704
      %v706 = vpop.f32.mrb[0].mxu0
      %v707 = vpop.f32.mrb[0].mxu0
      %v708 = vadd.f32 0.0, %v707
      %v709 = vpop.f32.mrb[0].mxu0
      %710 = vdwg.mxu0
      %v711 = vld [vmem:[#allocation3] sm:$0xff]
      %v712 = vld [vmem:[#allocation3 + $0x8] sm:$0xff]
      %v713 = vld [vmem:[#allocation3 + $0x10] sm:$0xff]
      %v714 = vld [vmem:[#allocation3 + $0x18] sm:$0xff]
      %v715 = vld [vmem:[#allocation3 + $0x20] sm:$0xff]
      %v716 = vld [vmem:[#allocation3 + $0x28] sm:$0xff]
      %v717 = vld [vmem:[#allocation3 + $0x30] sm:$0xff]
      %v718 = vld [vmem:[#allocation3 + $0x38] sm:$0xff]
      %v719 = vld [vmem:[#allocation3 + $0x40] sm:$0xff]
      %v720 = vld [vmem:[#allocation3 + $0x48] sm:$0xff]
      %v721 = vld [vmem:[#allocation3 + $0x50] sm:$0xff]
      %v722 = vld [vmem:[#allocation3 + $0x58] sm:$0xff]
      %v723 = vld [vmem:[#allocation3 + $0x60] sm:$0xff]
      %v724 = vld [vmem:[#allocation3 + $0x68] sm:$0xff]
      %v725 = vld [vmem:[#allocation3 + $0x70] sm:$0xff]
      %v726 = vld [vmem:[#allocation3 + $0x78] sm:$0xff]
      %727 = vmax.xlane.f32.xlu0 %v649
      %v728 = vpop.xlane.xlu0 %727
      %729 = vmax.xlane.f32.xlu0 %v652
      %v730 = vpop.xlane.xlu0 %729
      %731 = vmax.xlane.f32.xlu0 %v657
      %v732 = vpop.xlane.xlu0 %731
      %733 = vmax.xlane.f32.xlu0 %v660
      %v734 = vpop.xlane.xlu0 %733
      %735 = vmax.xlane.f32.xlu0 %v665
      %v736 = vpop.xlane.xlu0 %735
      %737 = vmax.xlane.f32.xlu0 %v668
      %v738 = vpop.xlane.xlu0 %737
      %739 = vmax.xlane.f32.xlu0 %v673
      %v740 = vpop.xlane.xlu0 %739
      %741 = vmax.xlane.f32.xlu0 %v676
      %v742 = vpop.xlane.xlu0 %741
      %743 = vmax.xlane.f32.xlu0 %v681
      %v744 = vpop.xlane.xlu0 %743
      %745 = vmax.xlane.f32.xlu0 %v684
      %v746 = vpop.xlane.xlu0 %745
      %747 = vmax.xlane.f32.xlu0 %v689
      %v748 = vpop.xlane.xlu0 %747
      %749 = vmax.xlane.f32.xlu0 %v692
      %v750 = vpop.xlane.xlu0 %749
      %751 = vmax.xlane.f32.xlu0 %v697
      %v752 = vpop.xlane.xlu0 %751
      %753 = vmax.xlane.f32.xlu0 %v700
      %v754 = vpop.xlane.xlu0 %753
      %755 = vmax.xlane.f32.xlu0 %v705
      %v756 = vpop.xlane.xlu0 %755
      %757 = vmax.xlane.f32.xlu0 %v708
      %v758 = vpop.xlane.xlu0 %757
      %v759 = vmax.f32 %v711, %v728
      %v760 = vmax.f32 %v712, %v730
      %v761 = vmax.f32 %v713, %v732
      %v762 = vmax.f32 %v714, %v734
      %v763 = vmax.f32 %v715, %v736
      %v764 = vmax.f32 %v716, %v738
      %v765 = vmax.f32 %v717, %v740
      %v766 = vmax.f32 %v718, %v742
      %v767 = vmax.f32 %v719, %v744
      %v768 = vmax.f32 %v720, %v746
      %v769 = vmax.f32 %v721, %v748
      %v770 = vmax.f32 %v722, %v750
      %v771 = vmax.f32 %v723, %v752
      %v772 = vmax.f32 %v724, %v754
      %v773 = vmax.f32 %v725, %v756
      %v774 = vmax.f32 %v726, %v758
      %v775 = vsub.f32 %v711, %v759
      %v776 = vsub.f32 %v712, %v760
      %v777 = vsub.f32 %v713, %v761
      %v778 = vsub.f32 %v714, %v762
      %v779 = vsub.f32 %v715, %v763
      %v780 = vsub.f32 %v716, %v764
      %v781 = vsub.f32 %v717, %v765
      %v782 = vsub.f32 %v718, %v766
      %v783 = vsub.f32 %v719, %v767
      %v784 = vsub.f32 %v720, %v768
      %v785 = vsub.f32 %v721, %v769
      %v786 = vsub.f32 %v722, %v770
      %v787 = vsub.f32 %v723, %v771
      %v788 = vsub.f32 %v724, %v772
      %v789 = vsub.f32 %v725, %v773
      %v790 = vsub.f32 %v726, %v774
      %v791 = vmul.f32 %v775, 1.442695
      %v792 = vpow.pop %v791
      %v793 = vmul.f32 %v776, 1.442695
      %v794 = vpow.pop %v793
      %v795 = vmul.f32 %v777, 1.442695
      %v796 = vpow.pop %v795
      %v797 = vmul.f32 %v778, 1.442695
      %v798 = vpow.pop %v797
      %v799 = vmul.f32 %v779, 1.442695
      %v800 = vpow.pop %v799
      %v801 = vmul.f32 %v780, 1.442695
      %v802 = vpow.pop %v801
      %v803 = vmul.f32 %v781, 1.442695
      %v804 = vpow.pop %v803
      %v805 = vmul.f32 %v782, 1.442695
      %v806 = vpow.pop %v805
      %v807 = vmul.f32 %v783, 1.442695
      %v808 = vpow.pop %v807
      %v809 = vmul.f32 %v784, 1.442695
      %v810 = vpow.pop %v809
      %v811 = vmul.f32 %v785, 1.442695
      %v812 = vpow.pop %v811
      %v813 = vmul.f32 %v786, 1.442695
      %v814 = vpow.pop %v813
      %v815 = vmul.f32 %v787, 1.442695
      %v816 = vpow.pop %v815
      %v817 = vmul.f32 %v788, 1.442695
      %v818 = vpow.pop %v817
      %v819 = vmul.f32 %v789, 1.442695
      %v820 = vpow.pop %v819
      %v821 = vmul.f32 %v790, 1.442695
      %v822 = vpow.pop %v821
      %824 = vset.pattern.permute.xlu0 0
      %825 = vperm.xlu0 %824, %v759
      %v826 = vpop.permute.xlu0 %825
      %829 = vset.pattern.permute.xlu0 0
      %830 = vperm.xlu0 %829, %v760
      %v831 = vpop.permute.xlu0 %830
      %834 = vset.pattern.permute.xlu0 0
      %835 = vperm.xlu0 %834, %v761
      %v836 = vpop.permute.xlu0 %835
      %839 = vset.pattern.permute.xlu0 0
      %840 = vperm.xlu0 %839, %v762
      %v841 = vpop.permute.xlu0 %840
      %844 = vset.pattern.permute.xlu0 0
      %845 = vperm.xlu0 %844, %v763
      %v846 = vpop.permute.xlu0 %845
      %849 = vset.pattern.permute.xlu0 0
      %850 = vperm.xlu0 %849, %v764
      %v851 = vpop.permute.xlu0 %850
      %854 = vset.pattern.permute.xlu0 0
      %855 = vperm.xlu0 %854, %v765
      %v856 = vpop.permute.xlu0 %855
      %859 = vset.pattern.permute.xlu0 0
      %860 = vperm.xlu0 %859, %v766
      %v861 = vpop.permute.xlu0 %860
      %864 = vset.pattern.permute.xlu0 0
      %865 = vperm.xlu0 %864, %v767
      %v866 = vpop.permute.xlu0 %865
      %869 = vset.pattern.permute.xlu0 0
      %870 = vperm.xlu0 %869, %v768
      %v871 = vpop.permute.xlu0 %870
      %874 = vset.pattern.permute.xlu0 0
      %875 = vperm.xlu0 %874, %v769
      %v876 = vpop.permute.xlu0 %875
      %879 = vset.pattern.permute.xlu0 0
      %880 = vperm.xlu0 %879, %v770
      %v881 = vpop.permute.xlu0 %880
      %884 = vset.pattern.permute.xlu0 0
      %885 = vperm.xlu0 %884, %v771
      %v886 = vpop.permute.xlu0 %885
      %889 = vset.pattern.permute.xlu0 0
      %890 = vperm.xlu0 %889, %v772
      %v891 = vpop.permute.xlu0 %890
      %894 = vset.pattern.permute.xlu0 0
      %895 = vperm.xlu0 %894, %v773
      %v896 = vpop.permute.xlu0 %895
      %899 = vset.pattern.permute.xlu0 0
      %900 = vperm.xlu0 %899, %v774
      %v901 = vpop.permute.xlu0 %900
      %v903 = vsub.f32 %v649, %v826
      %v904 = vsub.f32 %v652, %v831
      %v905 = vsub.f32 %v657, %v836
      %v906 = vsub.f32 %v660, %v841
      %v907 = vsub.f32 %v665, %v846
      %v908 = vsub.f32 %v668, %v851
      %v909 = vsub.f32 %v673, %v856
      %v910 = vsub.f32 %v676, %v861
      %v911 = vsub.f32 %v681, %v866
      %v912 = vsub.f32 %v684, %v871
      %v913 = vsub.f32 %v689, %v876
      %v914 = vsub.f32 %v692, %v881
      %v915 = vsub.f32 %v697, %v886
      %v916 = vsub.f32 %v700, %v891
      %v917 = vsub.f32 %v705, %v896
      %v918 = vsub.f32 %v708, %v901
      %v919 = vmul.f32 %v903, 1.442695
      %v920 = vpow.pop %v919
      %v921 = vmul.f32 %v904, 1.442695
      %v922 = vpow.pop %v921
      %v923 = vmul.f32 %v905, 1.442695
      %v924 = vpow.pop %v923
      %v925 = vmul.f32 %v906, 1.442695
      %v926 = vpow.pop %v925
      %v927 = vmul.f32 %v907, 1.442695
      %v928 = vpow.pop %v927
      %v929 = vmul.f32 %v908, 1.442695
      %v930 = vpow.pop %v929
      %v931 = vmul.f32 %v909, 1.442695
      %v932 = vpow.pop %v931
      %v933 = vmul.f32 %v910, 1.442695
      %v934 = vpow.pop %v933
      %v935 = vmul.f32 %v911, 1.442695
      %v936 = vpow.pop %v935
      %v937 = vmul.f32 %v912, 1.442695
      %v938 = vpow.pop %v937
      %v939 = vmul.f32 %v913, 1.442695
      %v940 = vpow.pop %v939
      %v941 = vmul.f32 %v914, 1.442695
      %v942 = vpow.pop %v941
      %v943 = vmul.f32 %v915, 1.442695
      %v944 = vpow.pop %v943
      %v945 = vmul.f32 %v916, 1.442695
      %v946 = vpow.pop %v945
      %v947 = vmul.f32 %v917, 1.442695
      %v948 = vpow.pop %v947
      %v949 = vmul.f32 %v918, 1.442695
      %v950 = vpow.pop %v949
      %v951 = vld [vmem:[#allocation4] sm:$0xff]
      %v952 = vld [vmem:[#allocation4 + $0x8] sm:$0xff]
      %v953 = vld [vmem:[#allocation4 + $0x10] sm:$0xff]
      %v954 = vld [vmem:[#allocation4 + $0x18] sm:$0xff]
      %v955 = vld [vmem:[#allocation4 + $0x20] sm:$0xff]
      %v956 = vld [vmem:[#allocation4 + $0x28] sm:$0xff]
      %v957 = vld [vmem:[#allocation4 + $0x30] sm:$0xff]
      %v958 = vld [vmem:[#allocation4 + $0x38] sm:$0xff]
      %v959 = vld [vmem:[#allocation4 + $0x40] sm:$0xff]
      %v960 = vld [vmem:[#allocation4 + $0x48] sm:$0xff]
      %v961 = vld [vmem:[#allocation4 + $0x50] sm:$0xff]
      %v962 = vld [vmem:[#allocation4 + $0x58] sm:$0xff]
      %v963 = vld [vmem:[#allocation4 + $0x60] sm:$0xff]
      %v964 = vld [vmem:[#allocation4 + $0x68] sm:$0xff]
      %v965 = vld [vmem:[#allocation4 + $0x70] sm:$0xff]
      %v966 = vld [vmem:[#allocation4 + $0x78] sm:$0xff]
      %v967 = vmul.f32 %v792, %v951
      %v968 = vmul.f32 %v794, %v952
      %v969 = vmul.f32 %v796, %v953
      %v970 = vmul.f32 %v798, %v954
      %v971 = vmul.f32 %v800, %v955
      %v972 = vmul.f32 %v802, %v956
      %v973 = vmul.f32 %v804, %v957
      %v974 = vmul.f32 %v806, %v958
      %v975 = vmul.f32 %v808, %v959
      %v976 = vmul.f32 %v810, %v960
      %v977 = vmul.f32 %v812, %v961
      %v978 = vmul.f32 %v814, %v962
      %v979 = vmul.f32 %v816, %v963
      %v980 = vmul.f32 %v818, %v964
      %v981 = vmul.f32 %v820, %v965
      %v982 = vmul.f32 %v822, %v966
      %983 = vadd.xlane.f32.xlu0 %v920
      %v984 = vpop.xlane.xlu0 %983
      %985 = vadd.xlane.f32.xlu0 %v922
      %v986 = vpop.xlane.xlu0 %985
      %987 = vadd.xlane.f32.xlu0 %v924
      %v988 = vpop.xlane.xlu0 %987
      %989 = vadd.xlane.f32.xlu0 %v926
      %v990 = vpop.xlane.xlu0 %989
      %991 = vadd.xlane.f32.xlu0 %v928
      %v992 = vpop.xlane.xlu0 %991
      %993 = vadd.xlane.f32.xlu0 %v930
      %v994 = vpop.xlane.xlu0 %993
      %995 = vadd.xlane.f32.xlu0 %v932
      %v996 = vpop.xlane.xlu0 %995
      %997 = vadd.xlane.f32.xlu0 %v934
      %v998 = vpop.xlane.xlu0 %997
      %999 = vadd.xlane.f32.xlu0 %v936
      %v1000 = vpop.xlane.xlu0 %999
      %1001 = vadd.xlane.f32.xlu0 %v938
      %v1002 = vpop.xlane.xlu0 %1001
      %1003 = vadd.xlane.f32.xlu0 %v940
      %v1004 = vpop.xlane.xlu0 %1003
      %1005 = vadd.xlane.f32.xlu0 %v942
      %v1006 = vpop.xlane.xlu0 %1005
      %1007 = vadd.xlane.f32.xlu0 %v944
      %v1008 = vpop.xlane.xlu0 %1007
      %1009 = vadd.xlane.f32.xlu0 %v946
      %v1010 = vpop.xlane.xlu0 %1009
      %1011 = vadd.xlane.f32.xlu0 %v948
      %v1012 = vpop.xlane.xlu0 %1011
      %1013 = vadd.xlane.f32.xlu0 %v950
      %v1014 = vpop.xlane.xlu0 %1013
      %v1015 = vadd.f32 %v967, %v984
      %v1016 = vadd.f32 %v968, %v986
      %v1017 = vadd.f32 %v969, %v988
      %v1018 = vadd.f32 %v970, %v990
      %v1019 = vadd.f32 %v971, %v992
      %v1020 = vadd.f32 %v972, %v994
      %v1021 = vadd.f32 %v973, %v996
      %v1022 = vadd.f32 %v974, %v998
      %v1023 = vadd.f32 %v975, %v1000
      %v1024 = vadd.f32 %v976, %v1002
      %v1025 = vadd.f32 %v977, %v1004
      %v1026 = vadd.f32 %v978, %v1006
      %v1027 = vadd.f32 %v979, %v1008
      %v1028 = vadd.f32 %v980, %v1010
      %v1029 = vadd.f32 %v981, %v1012
      %v1030 = vadd.f32 %v982, %v1014
      %vm1031 = vcmask 7168
      %1032 = vst.msk [vmem:[#allocation4] sm:$0xff] %vm1031, %v1015
      %1033 = vst.msk [vmem:[#allocation4 + $0x8] sm:$0xff] %vm1031, %v1016
      %1034 = vst.msk [vmem:[#allocation4 + $0x10] sm:$0xff] %vm1031, %v1017
      %1035 = vst.msk [vmem:[#allocation4 + $0x18] sm:$0xff] %vm1031, %v1018
      %1036 = vst.msk [vmem:[#allocation4 + $0x20] sm:$0xff] %vm1031, %v1019
      %1037 = vst.msk [vmem:[#allocation4 + $0x28] sm:$0xff] %vm1031, %v1020
      %1038 = vst.msk [vmem:[#allocation4 + $0x30] sm:$0xff] %vm1031, %v1021
      %1039 = vst.msk [vmem:[#allocation4 + $0x38] sm:$0xff] %vm1031, %v1022
      %1040 = vst.msk [vmem:[#allocation4 + $0x40] sm:$0xff] %vm1031, %v1023
      %1041 = vst.msk [vmem:[#allocation4 + $0x48] sm:$0xff] %vm1031, %v1024
      %1042 = vst.msk [vmem:[#allocation4 + $0x50] sm:$0xff] %vm1031, %v1025
      %1043 = vst.msk [vmem:[#allocation4 + $0x58] sm:$0xff] %vm1031, %v1026
      %1044 = vst.msk [vmem:[#allocation4 + $0x60] sm:$0xff] %vm1031, %v1027
      %1045 = vst.msk [vmem:[#allocation4 + $0x68] sm:$0xff] %vm1031, %v1028
      %1046 = vst.msk [vmem:[#allocation4 + $0x70] sm:$0xff] %vm1031, %v1029
      %1047 = vst.msk [vmem:[#allocation4 + $0x78] sm:$0xff] %vm1031, %v1030
      %v1048 = vld [vmem:[#allocation5] sm:$0xff]
      %v1049 = vld [vmem:[#allocation5 + $0x8] sm:$0xff]
      %v1050 = vld [vmem:[#allocation5 + $0x10] sm:$0xff]
      %v1051 = vld [vmem:[#allocation5 + $0x18] sm:$0xff]
      %v1052 = vld [vmem:[#allocation5 + $0x20] sm:$0xff]
      %v1053 = vld [vmem:[#allocation5 + $0x28] sm:$0xff]
      %v1054 = vld [vmem:[#allocation5 + $0x30] sm:$0xff]
      %v1055 = vld [vmem:[#allocation5 + $0x38] sm:$0xff]
      %v1056 = vld [vmem:[#allocation5 + $0x40] sm:$0xff]
      %v1057 = vld [vmem:[#allocation5 + $0x48] sm:$0xff]
      %v1058 = vld [vmem:[#allocation5 + $0x50] sm:$0xff]
      %v1059 = vld [vmem:[#allocation5 + $0x58] sm:$0xff]
      %v1060 = vld [vmem:[#allocation5 + $0x60] sm:$0xff]
      %v1061 = vld [vmem:[#allocation5 + $0x68] sm:$0xff]
      %v1062 = vld [vmem:[#allocation5 + $0x70] sm:$0xff]
      %v1063 = vld [vmem:[#allocation5 + $0x78] sm:$0xff]
      %1065 = vset.pattern.permute.xlu0 0
      %1066 = vperm.xlu0 %1065, %v792
      %v1067 = vpop.permute.xlu0 %1066
      %1070 = vset.pattern.permute.xlu0 0
      %1071 = vperm.xlu0 %1070, %v794
      %v1072 = vpop.permute.xlu0 %1071
      %1075 = vset.pattern.permute.xlu0 0
      %1076 = vperm.xlu0 %1075, %v796
      %v1077 = vpop.permute.xlu0 %1076
      %1080 = vset.pattern.permute.xlu0 0
      %1081 = vperm.xlu0 %1080, %v798
      %v1082 = vpop.permute.xlu0 %1081
      %1085 = vset.pattern.permute.xlu0 0
      %1086 = vperm.xlu0 %1085, %v800
      %v1087 = vpop.permute.xlu0 %1086
      %1090 = vset.pattern.permute.xlu0 0
      %1091 = vperm.xlu0 %1090, %v802
      %v1092 = vpop.permute.xlu0 %1091
      %1095 = vset.pattern.permute.xlu0 0
      %1096 = vperm.xlu0 %1095, %v804
      %v1097 = vpop.permute.xlu0 %1096
      %1100 = vset.pattern.permute.xlu0 0
      %1101 = vperm.xlu0 %1100, %v806
      %v1102 = vpop.permute.xlu0 %1101
      %1105 = vset.pattern.permute.xlu0 0
      %1106 = vperm.xlu0 %1105, %v808
      %v1107 = vpop.permute.xlu0 %1106
      %1110 = vset.pattern.permute.xlu0 0
      %1111 = vperm.xlu0 %1110, %v810
      %v1112 = vpop.permute.xlu0 %1111
      %1115 = vset.pattern.permute.xlu0 0
      %1116 = vperm.xlu0 %1115, %v812
      %v1117 = vpop.permute.xlu0 %1116
      %1120 = vset.pattern.permute.xlu0 0
      %1121 = vperm.xlu0 %1120, %v814
      %v1122 = vpop.permute.xlu0 %1121
      %1125 = vset.pattern.permute.xlu0 0
      %1126 = vperm.xlu0 %1125, %v816
      %v1127 = vpop.permute.xlu0 %1126
      %1130 = vset.pattern.permute.xlu0 0
      %1131 = vperm.xlu0 %1130, %v818
      %v1132 = vpop.permute.xlu0 %1131
      %1135 = vset.pattern.permute.xlu0 0
      %1136 = vperm.xlu0 %1135, %v820
      %v1137 = vpop.permute.xlu0 %1136
      %1140 = vset.pattern.permute.xlu0 0
      %1141 = vperm.xlu0 %1140, %v822
      %v1142 = vpop.permute.xlu0 %1141
      %v1144 = vmul.f32 %v1067, %v1048
      %v1145 = vmul.f32 %v1072, %v1049
      %v1146 = vmul.f32 %v1077, %v1050
      %v1147 = vmul.f32 %v1082, %v1051
      %v1148 = vmul.f32 %v1087, %v1052
      %v1149 = vmul.f32 %v1092, %v1053
      %v1150 = vmul.f32 %v1097, %v1054
      %v1151 = vmul.f32 %v1102, %v1055
      %v1152 = vmul.f32 %v1107, %v1056
      %v1153 = vmul.f32 %v1112, %v1057
      %v1154 = vmul.f32 %v1117, %v1058
      %v1155 = vmul.f32 %v1122, %v1059
      %v1156 = vmul.f32 %v1127, %v1060
      %v1157 = vmul.f32 %v1132, %v1061
      %v1158 = vmul.f32 %v1137, %v1062
      %v1159 = vmul.f32 %v1142, %v1063
      %v1160 = vpack.c.bf16 %v922, %v920
      %v1161 = vpack.c.bf16 %v926, %v924
      %v1162 = vpack.c.bf16 %v930, %v928
      %v1163 = vpack.c.bf16 %v934, %v932
      %v1164 = vpack.c.bf16 %v938, %v936
      %v1165 = vpack.c.bf16 %v942, %v940
      %v1166 = vpack.c.bf16 %v946, %v944
      %v1167 = vpack.c.bf16 %v950, %v948
      %v1168 = vunpack.c.h.b16 %v542
      %v1169 = vunpack.c.h.b16 %v543
      %v1170 = vunpack.c.h.b16 %v544
      %v1171 = vunpack.c.h.b16 %v545
      %v1172 = vunpack.c.h.b16 %v546
      %v1173 = vunpack.c.h.b16 %v547
      %v1174 = vunpack.c.h.b16 %v548
      %v1175 = vunpack.c.h.b16 %v549
      %v1176 = vunpack.c.h.b16 %v550
      %v1177 = vunpack.c.h.b16 %v551
      %v1178 = vunpack.c.h.b16 %v552
      %v1179 = vunpack.c.h.b16 %v553
      %v1180 = vunpack.c.h.b16 %v554
      %v1181 = vunpack.c.h.b16 %v555
      %v1182 = vunpack.c.h.b16 %v556
      %v1183 = vunpack.c.h.b16 %v557
      %v1184 = vpack.c.b16 %v1169, %v1168
      %v1185 = vpack.c.b16 %v1171, %v1170
      %v1186 = vpack.c.b16 %v1173, %v1172
      %v1187 = vpack.c.b16 %v1175, %v1174
      %v1188 = vpack.c.b16 %v1177, %v1176
      %v1189 = vpack.c.b16 %v1179, %v1178
      %v1190 = vpack.c.b16 %v1181, %v1180
      %v1191 = vpack.c.b16 %v1183, %v1182
      %1200 = vmatprep.subr.bf16.mxu0 0
      %1201 = vmatpush1.bf16.msra.mxu0 %v1184
      %1202 = vmatprep.subr.bf16.mxu0 0
      %1203 = vmatpush1.bf16.msra.mxu0 %v1185
      %1204 = vmatprep.subr.bf16.mxu0 0
      %1205 = vmatpush1.bf16.msra.mxu0 %v1186
      %1206 = vmatprep.subr.bf16.mxu0 0
      %1207 = vmatpush1.bf16.msra.mxu0 %v1187
      %1208 = vmatprep.subr.bf16.mxu0 0
      %1209 = vmatpush1.bf16.msra.mxu0 %v1188
      %1210 = vmatprep.subr.bf16.mxu0 0
      %1211 = vmatpush1.bf16.msra.mxu0 %v1189
      %1212 = vmatprep.subr.bf16.mxu0 0
      %1213 = vmatpush1.bf16.msra.mxu0 %v1190
      %1214 = vmatprep.subr.bf16.mxu0 0
      %1215 = vmatpush1.bf16.msra.mxu0 %v1191
      %1216 = vmatprep.subr.bf16.mxu0 0
      %1217 = vmatpush1.bf16.msra.mxu0 0
      %1218 = vmatprep.subr.bf16.mxu0 0
      %1219 = vmatpush1.bf16.msra.mxu0 0
      %1220 = vmatprep.subr.bf16.mxu0 0
      %1221 = vmatpush1.bf16.msra.mxu0 0
      %1222 = vmatprep.subr.bf16.mxu0 0
      %1223 = vmatpush1.bf16.msra.mxu0 0
      %1224 = vmatprep.subr.bf16.mxu0 0
      %1225 = vmatpush1.bf16.msra.mxu0 0
      %1226 = vmatprep.subr.bf16.mxu0 0
      %1227 = vmatpush1.bf16.msra.mxu0 0
      %1228 = vmatprep.subr.bf16.mxu0 0
      %1229 = vmatpush1.bf16.msra.mxu0 0
      %1230 = vmatprep.subr.bf16.mxu0 0
      %1231 = vmatpush1.bf16.msra.mxu0 0
      %1232 = vmatprep.mubr.bf16.mxu0 0
      %1233 = vmatmul.mubr.bf16.gmra.mrb[0].mxu0 %v1160
      %v1234 = vpop.f32.mrb[0].mxu0
      %v1235 = vadd.f32 0.0, %v1234
      %v1236 = vpop.f32.mrb[0].mxu0
      %v1237 = vpop.f32.mrb[0].mxu0
      %v1238 = vadd.f32 0.0, %v1237
      %v1239 = vpop.f32.mrb[0].mxu0
      %1240 = vmatprep.mubr.bf16.mxu0 0
      %1241 = vmatmul.mubr.bf16.gmra.mrb[0].mxu0 %v1161
      %v1242 = vpop.f32.mrb[0].mxu0
      %v1243 = vadd.f32 0.0, %v1242
      %v1244 = vpop.f32.mrb[0].mxu0
      %v1245 = vpop.f32.mrb[0].mxu0
      %v1246 = vadd.f32 0.0, %v1245
      %v1247 = vpop.f32.mrb[0].mxu0
      %1248 = vmatprep.mubr.bf16.mxu0 0
      %1249 = vmatmul.mubr.bf16.gmra.mrb[0].mxu0 %v1162
      %v1250 = vpop.f32.mrb[0].mxu0
      %v1251 = vadd.f32 0.0, %v1250
      %v1252 = vpop.f32.mrb[0].mxu0
      %v1253 = vpop.f32.mrb[0].mxu0
      %v1254 = vadd.f32 0.0, %v1253
      %v1255 = vpop.f32.mrb[0].mxu0
      %1256 = vmatprep.mubr.bf16.mxu0 0
      %1257 = vmatmul.mubr.bf16.gmra.mrb[0].mxu0 %v1163
      %v1258 = vpop.f32.mrb[0].mxu0
      %v1259 = vadd.f32 0.0, %v1258
      %v1260 = vpop.f32.mrb[0].mxu0
      %v1261 = vpop.f32.mrb[0].mxu0
      %v1262 = vadd.f32 0.0, %v1261
      %v1263 = vpop.f32.mrb[0].mxu0
      %1264 = vmatprep.mubr.bf16.mxu0 0
      %1265 = vmatmul.mubr.bf16.gmra.mrb[0].mxu0 %v1164
      %v1266 = vpop.f32.mrb[0].mxu0
      %v1267 = vadd.f32 0.0, %v1266
      %v1268 = vpop.f32.mrb[0].mxu0
      %v1269 = vpop.f32.mrb[0].mxu0
      %v1270 = vadd.f32 0.0, %v1269
      %v1271 = vpop.f32.mrb[0].mxu0
      %1272 = vmatprep.mubr.bf16.mxu0 0
      %1273 = vmatmul.mubr.bf16.gmra.mrb[0].mxu0 %v1165
      %v1274 = vpop.f32.mrb[0].mxu0
      %v1275 = vadd.f32 0.0, %v1274
      %v1276 = vpop.f32.mrb[0].mxu0
      %v1277 = vpop.f32.mrb[0].mxu0
      %v1278 = vadd.f32 0.0, %v1277
      %v1279 = vpop.f32.mrb[0].mxu0
      %1280 = vmatprep.mubr.bf16.mxu0 0
      %1281 = vmatmul.mubr.bf16.gmra.mrb[0].mxu0 %v1166
      %v1282 = vpop.f32.mrb[0].mxu0
      %v1283 = vadd.f32 0.0, %v1282
      %v1284 = vpop.f32.mrb[0].mxu0
      %v1285 = vpop.f32.mrb[0].mxu0
      %v1286 = vadd.f32 0.0, %v1285
      %v1287 = vpop.f32.mrb[0].mxu0
      %1288 = vmatprep.mubr.bf16.mxu0 0
      %1289 = vmatmul.mubr.bf16.gmra.mrb[0].mxu0 %v1167
      %v1290 = vpop.f32.mrb[0].mxu0
      %v1291 = vadd.f32 0.0, %v1290
      %v1292 = vpop.f32.mrb[0].mxu0
      %v1293 = vpop.f32.mrb[0].mxu0
      %v1294 = vadd.f32 0.0, %v1293
      %v1295 = vpop.f32.mrb[0].mxu0
      %1296 = vdwg.mxu0
      %v1297 = vadd.f32 %v1144, %v1235
      %v1298 = vadd.f32 %v1145, %v1238
      %v1299 = vadd.f32 %v1146, %v1243
      %v1300 = vadd.f32 %v1147, %v1246
      %v1301 = vadd.f32 %v1148, %v1251
      %v1302 = vadd.f32 %v1149, %v1254
      %v1303 = vadd.f32 %v1150, %v1259
      %v1304 = vadd.f32 %v1151, %v1262
      %v1305 = vadd.f32 %v1152, %v1267
      %v1306 = vadd.f32 %v1153, %v1270
      %v1307 = vadd.f32 %v1154, %v1275
      %v1308 = vadd.f32 %v1155, %v1278
      %v1309 = vadd.f32 %v1156, %v1283
      %v1310 = vadd.f32 %v1157, %v1286
      %v1311 = vadd.f32 %v1158, %v1291
      %v1312 = vadd.f32 %v1159, %v1294
      %vm1313 = vcmask 130048
      %1314 = vst.msk [vmem:[#allocation5] sm:$0xff] %vm1313, %v1297
      %1315 = vst.msk [vmem:[#allocation5 + $0x8] sm:$0xff] %vm1313, %v1298
      %1316 = vst.msk [vmem:[#allocation5 + $0x10] sm:$0xff] %vm1313, %v1299
      %1317 = vst.msk [vmem:[#allocation5 + $0x18] sm:$0xff] %vm1313, %v1300
      %1318 = vst.msk [vmem:[#allocation5 + $0x20] sm:$0xff] %vm1313, %v1301
      %1319 = vst.msk [vmem:[#allocation5 + $0x28] sm:$0xff] %vm1313, %v1302
      %1320 = vst.msk [vmem:[#allocation5 + $0x30] sm:$0xff] %vm1313, %v1303
      %1321 = vst.msk [vmem:[#allocation5 + $0x38] sm:$0xff] %vm1313, %v1304
      %1322 = vst.msk [vmem:[#allocation5 + $0x40] sm:$0xff] %vm1313, %v1305
      %1323 = vst.msk [vmem:[#allocation5 + $0x48] sm:$0xff] %vm1313, %v1306
      %1324 = vst.msk [vmem:[#allocation5 + $0x50] sm:$0xff] %vm1313, %v1307
      %1325 = vst.msk [vmem:[#allocation5 + $0x58] sm:$0xff] %vm1313, %v1308
      %1326 = vst.msk [vmem:[#allocation5 + $0x60] sm:$0xff] %vm1313, %v1309
      %1327 = vst.msk [vmem:[#allocation5 + $0x68] sm:$0xff] %vm1313, %v1310
      %1328 = vst.msk [vmem:[#allocation5 + $0x70] sm:$0xff] %vm1313, %v1311
      %1329 = vst.msk [vmem:[#allocation5 + $0x78] sm:$0xff] %vm1313, %v1312
      %1330 = vst.msk [vmem:[#allocation3] sm:$0xff] %vm1031, %v759
      %1331 = vst.msk [vmem:[#allocation3 + $0x8] sm:$0xff] %vm1031, %v760
      %1332 = vst.msk [vmem:[#allocation3 + $0x10] sm:$0xff] %vm1031, %v761
      %1333 = vst.msk [vmem:[#allocation3 + $0x18] sm:$0xff] %vm1031, %v762
      %1334 = vst.msk [vmem:[#allocation3 + $0x20] sm:$0xff] %vm1031, %v763
      %1335 = vst.msk [vmem:[#allocation3 + $0x28] sm:$0xff] %vm1031, %v764
      %1336 = vst.msk [vmem:[#allocation3 + $0x30] sm:$0xff] %vm1031, %v765
      %1337 = vst.msk [vmem:[#allocation3 + $0x38] sm:$0xff] %vm1031, %v766
      %1338 = vst.msk [vmem:[#allocation3 + $0x40] sm:$0xff] %vm1031, %v767
      %1339 = vst.msk [vmem:[#allocation3 + $0x48] sm:$0xff] %vm1031, %v768
      %1340 = vst.msk [vmem:[#allocation3 + $0x50] sm:$0xff] %vm1031, %v769
      %1341 = vst.msk [vmem:[#allocation3 + $0x58] sm:$0xff] %vm1031, %v770
      %1342 = vst.msk [vmem:[#allocation3 + $0x60] sm:$0xff] %vm1031, %v771
      %1343 = vst.msk [vmem:[#allocation3 + $0x68] sm:$0xff] %vm1031, %v772
      %1344 = vst.msk [vmem:[#allocation3 + $0x70] sm:$0xff] %vm1031, %v773
      %1345 = vst.msk [vmem:[#allocation3 + $0x78] sm:$0xff] %vm1031, %v774
      %p1346 = scmp.eq.s32.totalorder %s24, 1
      // Predicated region
      $region45: #{pam_forward.1} parent=39 // pred_check
        %p1347 = pneg %p1346
      $region46: #{pam_forward.1} parent=39 // pred_check_branch
        %1349 = sbr.rel (%p1347) target = $region48
      $region47: #{pam_forward.1} parent=39 // pred_region
        %v1350 = vld [vmem:[#allocation4] sm:$0xff]
        %v1351 = vld [vmem:[#allocation4 + $0x8] sm:$0xff]
        %v1352 = vld [vmem:[#allocation4 + $0x10] sm:$0xff]
        %v1353 = vld [vmem:[#allocation4 + $0x18] sm:$0xff]
        %v1354 = vld [vmem:[#allocation4 + $0x20] sm:$0xff]
        %v1355 = vld [vmem:[#allocation4 + $0x28] sm:$0xff]
        %v1356 = vld [vmem:[#allocation4 + $0x30] sm:$0xff]
        %v1357 = vld [vmem:[#allocation4 + $0x38] sm:$0xff]
        %v1358 = vld [vmem:[#allocation4 + $0x40] sm:$0xff]
        %v1359 = vld [vmem:[#allocation4 + $0x48] sm:$0xff]
        %v1360 = vld [vmem:[#allocation4 + $0x50] sm:$0xff]
        %v1361 = vld [vmem:[#allocation4 + $0x58] sm:$0xff]
        %v1362 = vld [vmem:[#allocation4 + $0x60] sm:$0xff]
        %v1363 = vld [vmem:[#allocation4 + $0x68] sm:$0xff]
        %v1364 = vld [vmem:[#allocation4 + $0x70] sm:$0xff]
        %v1365 = vld [vmem:[#allocation4 + $0x78] sm:$0xff]
        %v1366 = vrcp.pop %v1350
        %v1367 = vrcp.pop %v1351
        %v1368 = vrcp.pop %v1352
        %v1369 = vrcp.pop %v1353
        %v1370 = vrcp.pop %v1354
        %v1371 = vrcp.pop %v1355
        %v1372 = vrcp.pop %v1356
        %v1373 = vrcp.pop %v1357
        %v1374 = vrcp.pop %v1358
        %v1375 = vrcp.pop %v1359
        %v1376 = vrcp.pop %v1360
        %v1377 = vrcp.pop %v1361
        %v1378 = vrcp.pop %v1362
        %v1379 = vrcp.pop %v1363
        %v1380 = vrcp.pop %v1364
        %v1381 = vrcp.pop %v1365
        %v1382 = vld [vmem:[#allocation5] sm:$0xff]
        %v1383 = vld [vmem:[#allocation5 + $0x8] sm:$0xff]
        %v1384 = vld [vmem:[#allocation5 + $0x10] sm:$0xff]
        %v1385 = vld [vmem:[#allocation5 + $0x18] sm:$0xff]
        %v1386 = vld [vmem:[#allocation5 + $0x20] sm:$0xff]
        %v1387 = vld [vmem:[#allocation5 + $0x28] sm:$0xff]
        %v1388 = vld [vmem:[#allocation5 + $0x30] sm:$0xff]
        %v1389 = vld [vmem:[#allocation5 + $0x38] sm:$0xff]
        %v1390 = vld [vmem:[#allocation5 + $0x40] sm:$0xff]
        %v1391 = vld [vmem:[#allocation5 + $0x48] sm:$0xff]
        %v1392 = vld [vmem:[#allocation5 + $0x50] sm:$0xff]
        %v1393 = vld [vmem:[#allocation5 + $0x58] sm:$0xff]
        %v1394 = vld [vmem:[#allocation5 + $0x60] sm:$0xff]
        %v1395 = vld [vmem:[#allocation5 + $0x68] sm:$0xff]
        %v1396 = vld [vmem:[#allocation5 + $0x70] sm:$0xff]
        %v1397 = vld [vmem:[#allocation5 + $0x78] sm:$0xff]
        %1399 = vset.pattern.permute.xlu0 0
        %1400 = vperm.xlu0 %1399, %v1366
        %v1401 = vpop.permute.xlu0 %1400
        %1404 = vset.pattern.permute.xlu0 0
        %1405 = vperm.xlu0 %1404, %v1367
        %v1406 = vpop.permute.xlu0 %1405
        %1409 = vset.pattern.permute.xlu0 0
        %1410 = vperm.xlu0 %1409, %v1368
        %v1411 = vpop.permute.xlu0 %1410
        %1414 = vset.pattern.permute.xlu0 0
        %1415 = vperm.xlu0 %1414, %v1369
        %v1416 = vpop.permute.xlu0 %1415
        %1419 = vset.pattern.permute.xlu0 0
        %1420 = vperm.xlu0 %1419, %v1370
        %v1421 = vpop.permute.xlu0 %1420
        %1424 = vset.pattern.permute.xlu0 0
        %1425 = vperm.xlu0 %1424, %v1371
        %v1426 = vpop.permute.xlu0 %1425
        %1429 = vset.pattern.permute.xlu0 0
        %1430 = vperm.xlu0 %1429, %v1372
        %v1431 = vpop.permute.xlu0 %1430
        %1434 = vset.pattern.permute.xlu0 0
        %1435 = vperm.xlu0 %1434, %v1373
        %v1436 = vpop.permute.xlu0 %1435
        %1439 = vset.pattern.permute.xlu0 0
        %1440 = vperm.xlu0 %1439, %v1374
        %v1441 = vpop.permute.xlu0 %1440
        %1444 = vset.pattern.permute.xlu0 0
        %1445 = vperm.xlu0 %1444, %v1375
        %v1446 = vpop.permute.xlu0 %1445
        %1449 = vset.pattern.permute.xlu0 0
        %1450 = vperm.xlu0 %1449, %v1376
        %v1451 = vpop.permute.xlu0 %1450
        %1454 = vset.pattern.permute.xlu0 0
        %1455 = vperm.xlu0 %1454, %v1377
        %v1456 = vpop.permute.xlu0 %1455
        %1459 = vset.pattern.permute.xlu0 0
        %1460 = vperm.xlu0 %1459, %v1378
        %v1461 = vpop.permute.xlu0 %1460
        %1464 = vset.pattern.permute.xlu0 0
        %1465 = vperm.xlu0 %1464, %v1379
        %v1466 = vpop.permute.xlu0 %1465
        %1469 = vset.pattern.permute.xlu0 0
        %1470 = vperm.xlu0 %1469, %v1380
        %v1471 = vpop.permute.xlu0 %1470
        %1474 = vset.pattern.permute.xlu0 0
        %1475 = vperm.xlu0 %1474, %v1381
        %v1476 = vpop.permute.xlu0 %1475
        %v1478 = vmul.f32 %v1382, %v1401
        %v1479 = vmul.f32 %v1383, %v1406
        %v1480 = vmul.f32 %v1384, %v1411
        %v1481 = vmul.f32 %v1385, %v1416
        %v1482 = vmul.f32 %v1386, %v1421
        %v1483 = vmul.f32 %v1387, %v1426
        %v1484 = vmul.f32 %v1388, %v1431
        %v1485 = vmul.f32 %v1389, %v1436
        %v1486 = vmul.f32 %v1390, %v1441
        %v1487 = vmul.f32 %v1391, %v1446
        %v1488 = vmul.f32 %v1392, %v1451
        %v1489 = vmul.f32 %v1393, %v1456
        %v1490 = vmul.f32 %v1394, %v1461
        %v1491 = vmul.f32 %v1395, %v1466
        %v1492 = vmul.f32 %v1396, %v1471
        %v1493 = vmul.f32 %v1397, %v1476
        %s1494 = sld [smem:[#allocation6]]
        %v1495 = vstv %s1494
        %v1496 = vmul.f32 %v1495, %v1478
        %v1497 = vmul.f32 %v1495, %v1479
        %v1498 = vmul.f32 %v1495, %v1480
        %v1499 = vmul.f32 %v1495, %v1481
        %v1500 = vmul.f32 %v1495, %v1482
        %v1501 = vmul.f32 %v1495, %v1483
        %v1502 = vmul.f32 %v1495, %v1484
        %v1503 = vmul.f32 %v1495, %v1485
        %v1504 = vmul.f32 %v1495, %v1486
        %v1505 = vmul.f32 %v1495, %v1487
        %v1506 = vmul.f32 %v1495, %v1488
        %v1507 = vmul.f32 %v1495, %v1489
        %v1508 = vmul.f32 %v1495, %v1490
        %v1509 = vmul.f32 %v1495, %v1491
        %v1510 = vmul.f32 %v1495, %v1492
        %v1511 = vmul.f32 %v1495, %v1493
        %v1512 = vld [vmem:[%s288] sm:$0xff]
        %v1513 = vld [vmem:[%s288 + $0x8] sm:$0xff]
        %v1514 = vld [vmem:[%s288 + $0x10] sm:$0xff]
        %v1515 = vld [vmem:[%s288 + $0x18] sm:$0xff]
        %v1516 = vld [vmem:[%s288 + $0x20] sm:$0xff]
        %v1517 = vld [vmem:[%s288 + $0x28] sm:$0xff]
        %v1518 = vld [vmem:[%s288 + $0x30] sm:$0xff]
        %v1519 = vld [vmem:[%s288 + $0x38] sm:$0xff]
        %v1520 = vld [vmem:[%s288 + $0x40] sm:$0xff]
        %v1521 = vld [vmem:[%s288 + $0x48] sm:$0xff]
        %v1522 = vld [vmem:[%s288 + $0x50] sm:$0xff]
        %v1523 = vld [vmem:[%s288 + $0x58] sm:$0xff]
        %v1524 = vld [vmem:[%s288 + $0x60] sm:$0xff]
        %v1525 = vld [vmem:[%s288 + $0x68] sm:$0xff]
        %v1526 = vld [vmem:[%s288 + $0x70] sm:$0xff]
        %v1527 = vld [vmem:[%s288 + $0x78] sm:$0xff]
        %v1528 = vadd.f32 %v1496, %v1512
        %v1529 = vadd.f32 %v1497, %v1513
        %v1530 = vadd.f32 %v1498, %v1514
        %v1531 = vadd.f32 %v1499, %v1515
        %v1532 = vadd.f32 %v1500, %v1516
        %v1533 = vadd.f32 %v1501, %v1517
        %v1534 = vadd.f32 %v1502, %v1518
        %v1535 = vadd.f32 %v1503, %v1519
        %v1536 = vadd.f32 %v1504, %v1520
        %v1537 = vadd.f32 %v1505, %v1521
        %v1538 = vadd.f32 %v1506, %v1522
        %v1539 = vadd.f32 %v1507, %v1523
        %v1540 = vadd.f32 %v1508, %v1524
        %v1541 = vadd.f32 %v1509, %v1525
        %v1542 = vadd.f32 %v1510, %v1526
        %v1543 = vadd.f32 %v1511, %v1527
        %1544 = vst.msk [vmem:[%s309] sm:$0xff] %vm1313, %v1528
        %1545 = vst.msk [vmem:[%s309 + $0x8] sm:$0xff] %vm1313, %v1529
        %1546 = vst.msk [vmem:[%s309 + $0x10] sm:$0xff] %vm1313, %v1530
        %1547 = vst.msk [vmem:[%s309 + $0x18] sm:$0xff] %vm1313, %v1531
        %1548 = vst.msk [vmem:[%s309 + $0x20] sm:$0xff] %vm1313, %v1532
        %1549 = vst.msk [vmem:[%s309 + $0x28] sm:$0xff] %vm1313, %v1533
        %1550 = vst.msk [vmem:[%s309 + $0x30] sm:$0xff] %vm1313, %v1534
        %1551 = vst.msk [vmem:[%s309 + $0x38] sm:$0xff] %vm1313, %v1535
        %1552 = vst.msk [vmem:[%s309 + $0x40] sm:$0xff] %vm1313, %v1536
        %1553 = vst.msk [vmem:[%s309 + $0x48] sm:$0xff] %vm1313, %v1537
        %1554 = vst.msk [vmem:[%s309 + $0x50] sm:$0xff] %vm1313, %v1538
        %1555 = vst.msk [vmem:[%s309 + $0x58] sm:$0xff] %vm1313, %v1539
        %1556 = vst.msk [vmem:[%s309 + $0x60] sm:$0xff] %vm1313, %v1540
        %1557 = vst.msk [vmem:[%s309 + $0x68] sm:$0xff] %vm1313, %v1541
        %1558 = vst.msk [vmem:[%s309 + $0x70] sm:$0xff] %vm1313, %v1542
        %1559 = vst.msk [vmem:[%s309 + $0x78] sm:$0xff] %vm1313, %v1543
      $region48: #{pam_forward.1} parent=39 // pred_fallthru
        _
      %s1560 = smul.u32 16, %s23
      %p1561 = scmp.lt.s32.totalorder %s22, 1
      %s1562 = scalar_select %p1561, %s22, 1
      %p1563 = scmp.lt.s32.totalorder %s1560, 31
      %s1564 = scalar_select %p1563, %s1560, 31
      %s1565 = smul.addr %s1562, 32
      %s1566 = sadd.s32 %s1564, %s1565
      %s1567 = smul.addr %s1566, 8
      %s1568 = scalar_lea.vmem %s5, %s1567
      // Predicated region
      $region49: #{pam_forward.1} parent=39 // pred_check
        %p1569 = pneg %p175
      $region50: #{pam_forward.1} parent=39 // pred_check_branch
        %1571 = sbr.rel (%p1569) target = $region52
      $region51: #{pam_forward.1} parent=39 // pred_region
        %s1572 = smul.u32 16, %s23
      $region52: #{pam_forward.1} parent=39 // pred_fallthru
        _
    $region40: #{pam_forward.1} parent=5 // pred_fallthru
      _
    %p1573 = scmp.le.s32.totalorder 2, %s12
    // Predicated region
    $region53: #{pam_forward.1} parent=5 // pred_check
      %p1574 = pneg %p1573
    $region54: #{pam_forward.1} parent=5 // pred_check_branch
      %1576 = sbr.rel (%p1574) target = $region56
    $region55: #{pam_forward.1} parent=5 // pred_region
      %s1577 = ssub.s32 %s12, 2
      // Predicated region
      $region57: #{pam_forward.1} parent=55 // pred_check
        %p1578 = pneg %p181
      $region58: #{pam_forward.1} parent=55 // pred_check_branch
        %1580 = sbr.rel (%p1578) target = $region60
      $region59: #{pam_forward.1} parent=55 // pred_region
        %s1581 = smul.u32 16, %s26
        %p1582 = scmp.lt.s32.totalorder %s25, 1
        %s1583 = scalar_select %p1582, %s25, 1
        %p1584 = scmp.lt.s32.totalorder %s1581, 31
        %s1585 = scalar_select %p1584, %s1581, 31
        %s1586 = smul.addr %s1583, 32
        %s1587 = sadd.s32 %s1585, %s1586
        %s1588 = smul.addr %s1587, 8
        %s1589 = scalar_lea.vmem %s5, %s1588
      $region60: #{pam_forward.1} parent=55 // pred_fallthru
        _
    $region56: #{pam_forward.1} parent=5 // pred_fallthru
      _
  $region6: #{pam_forward.1} parent=0 // loop_footer
    %s16 = sadd.s32 1, %s12
  $region7: #{pam_forward.1} parent=0 // loop_footer_branch
    %11 = sbr.rel target = $region3
  $region8: #{pam_forward.1} parent=0 // loop_exit
    _

</llo_original>
